<compile_context>
chip_gen: v7x
topology: tpu7x:2x2x1
jax: 0.10.0
libtpu: 0.0.40
codegen_flags: <defaults>
</compile_context>

<pallas_src>
import functools

import jax
import jax.numpy as jnp
from jax.experimental import pallas as pl
from jax.experimental.pallas import tpu as pltpu


def _single_step_loss_kernel(state_ref, action_ref,
                             w1s_ref, w1a_ref, b1_ref,
                             w2_ref, b2_ref,
                             w3_ref, b3_ref,
                             tgt_ref, out_ref, acc_ref,
                             *, tile_b, n_valid, out_dim):
    i = pl.program_id(0)

    @pl.when(i == 0)
    def _():
        acc_ref[...] = jnp.zeros_like(acc_ref)

    # Fused "concat": concat(state, action) @ W1 == state @ W1s + action @ W1a.
    h1 = (jnp.dot(state_ref[...], w1s_ref[...], preferred_element_type=jnp.float32)
          + jnp.dot(action_ref[...], w1a_ref[...], preferred_element_type=jnp.float32)
          + b1_ref[...])
    h1 = jnp.maximum(h1, 0.0)
    h2 = jnp.dot(h1, w2_ref[...], preferred_element_type=jnp.float32) + b2_ref[...]
    h2 = jnp.maximum(h2, 0.0)
    pred = jnp.dot(h2, w3_ref[...], preferred_element_type=jnp.float32) + b3_ref[...]

    # Squared error; mask out padded rows of the (possibly ragged) final tile.
    diff = pred - tgt_ref[...]
    sq = diff * diff
    row = i * tile_b + jax.lax.broadcasted_iota(jnp.int32, sq.shape, 0)
    sq = jnp.where(row < n_valid, sq, 0.0)

    # Running sum-of-squared-error accumulator (f32, persists across grid steps).
    acc_ref[...] += jnp.sum(sq, keepdims=True)

    @pl.when(i == pl.num_programs(0) - 1)
    def _():
        # 'mean' reduction over the TRUE element count (padding excluded).
        out_ref[...] = acc_ref[...] * (1.0 / float(n_valid * out_dim))


def single_step_loss(params, state, action, target_state, *, tile_b=128):
    """Scalar MSE between model(state, action) and target_state."""
    B, state_dim = state.shape
    action_dim = action.shape[-1]
    out_dim = target_state.shape[-1]
    hidden = params["W2"].shape[0]

    state = state.astype(jnp.float32)
    action = action.astype(jnp.float32)
    target_state = target_state.astype(jnp.float32)

    # Pad the batch up to a multiple of tile_b; padded rows are masked in-kernel.
    n_tiles = pl.cdiv(B, tile_b)
    b_padded = n_tiles * tile_b
    pad = b_padded - B
    if pad:
        state = jnp.pad(state, ((0, pad), (0, 0)))
        action = jnp.pad(action, ((0, pad), (0, 0)))
        target_state = jnp.pad(target_state, ((0, pad), (0, 0)))

    kernel = functools.partial(_single_step_loss_kernel,
                               tile_b=tile_b, n_valid=B, out_dim=out_dim)

    # Un-gridded (resident) blocks for the weights / biases.
    def full(shape):
        return pl.BlockSpec(shape, lambda i: (0, 0))

    flops = 2 * b_padded * (state_dim * hidden + action_dim * hidden
                            + hidden * hidden + hidden * out_dim)
    bytes_accessed = 4 * (b_padded * (state_dim + action_dim + out_dim)
                          + (state_dim + action_dim) * hidden
                          + hidden * hidden + hidden * out_dim
                          + 2 * hidden + out_dim + 1)

    out = pl.pallas_call(
        kernel,
        out_shape=jax.ShapeDtypeStruct((1, 1), jnp.float32),
        grid_spec=pltpu.PrefetchScalarGridSpec(
            num_scalar_prefetch=0,
            grid=(n_tiles,),
            in_specs=[
                pl.BlockSpec((tile_b, state_dim), lambda i: (i, 0)),   # state tile
                pl.BlockSpec((tile_b, action_dim), lambda i: (i, 0)),  # action tile
                full((state_dim, hidden)),                             # W1s
                full((action_dim, hidden)),                            # W1a
                full((1, hidden)),                                     # b1
                full((hidden, hidden)),                                # W2
                full((1, hidden)),                                     # b2
                full((hidden, out_dim)),                               # W3
                full((1, out_dim)),                                    # b3
                pl.BlockSpec((tile_b, out_dim), lambda i: (i, 0)),     # target tile
            ],
            out_specs=pl.BlockSpec((1, 1), lambda i: (0, 0)),
            scratch_shapes=[pltpu.VMEM((1, 1), jnp.float32)],
        ),
        # Batch axis is a reduction into a single scalar -> "arbitrary".
        # (On v7x, a further ~2x is available by splitting into two partial
        #  sums across the two TensorCores — only worth it at compute-bound sizes.)
        compiler_params=pltpu.CompilerParams(dimension_semantics=("arbitrary",)),
        cost_estimate=pl.CostEstimate(flops=flops, transcendentals=0,
                                      bytes_accessed=bytes_accessed),
    )(state, action,
      params["W1s"], params["W1a"], params["b1"],
      params["W2"], params["b2"],
      params["W3"], params["b3"],
      target_state)
    return out[0, 0]


def init_params(key, state_dim, action_dim, hidden, out_dim):
    k1, k2, k3 = jax.random.split(key, 3)
    scale = 0.1
    # W1 is split once here (state rows / action rows) so the kernel never
    # needs the concatenated input.
    w1 = scale * jax.random.normal(k1, (state_dim + action_dim, hidden), jnp.float32)
    return {
        "W1s": w1[:state_dim],
        "W1a": w1[state_dim:],
        "b1": jnp.zeros((1, hidden), jnp.float32),
        "W2": scale * jax.random.normal(k2, (hidden, hidden), jnp.float32),
        "b2": jnp.zeros((1, hidden), jnp.float32),
        "W3": scale * jax.random.normal(k3, (hidden, out_dim), jnp.float32),
        "b3": jnp.zeros((1, out_dim), jnp.float32),
    }


if __name__ == "__main__":
    batch = 200          # deliberately NOT a multiple of tile_b -> ragged tile
    state_dim = 4
    action_dim = 4
    hidden = 128         # lane-dense (multiple of 128) feature width
    tile_b = 128

    key = jax.random.PRNGKey(0)
    kp, ks, ka, kt = jax.random.split(key, 4)

    params = init_params(kp, state_dim, action_dim, hidden, state_dim)
    state = jax.random.normal(ks, (batch, state_dim), jnp.float32)
    action = jax.random.normal(ka, (batch, action_dim), jnp.float32)
    target_state = jax.random.normal(kt, (batch, state_dim), jnp.float32)

    loss = single_step_loss(params, state, action, target_state, tile_b=tile_b)
    jax.block_until_ready(loss)

    # Pure-JAX reference (reassemble W1 to match the PyTorch module exactly).
    w1 = jnp.concatenate([params["W1s"], params["W1a"]], axis=0)
    x = jnp.concatenate([state, action], axis=-1)
    h1 = jnp.maximum(x @ w1 + params["b1"], 0.0)
    h2 = jnp.maximum(h1 @ params["W2"] + params["b2"], 0.0)
    pred = h2 @ params["W3"] + params["b3"]
    ref = jnp.mean((pred - target_state) ** 2)

    assert jnp.allclose(loss, ref, rtol=1e-4, atol=1e-5), (loss, ref)
    print("KERNEL_OK")
</pallas_src>

<mosaic_0001>
module attributes {stable_mosaic.version = 11 : i64} {
  func.func @_single_step_loss_kernel(%arg0: i32, %arg1: memref<128x4xf32, #tpu.memory_space<vmem>>, %arg2: memref<128x4xf32, #tpu.memory_space<vmem>>, %arg3: memref<4x128xf32, #tpu.memory_space<vmem>>, %arg4: memref<4x128xf32, #tpu.memory_space<vmem>>, %arg5: memref<1x128xf32, #tpu.memory_space<vmem>>, %arg6: memref<128x128xf32, #tpu.memory_space<vmem>>, %arg7: memref<1x128xf32, #tpu.memory_space<vmem>>, %arg8: memref<128x4xf32, #tpu.memory_space<vmem>>, %arg9: memref<1x4xf32, #tpu.memory_space<vmem>>, %arg10: memref<128x4xf32, #tpu.memory_space<vmem>>, %arg11: memref<1x1xf32, #tpu.memory_space<vmem>>, %arg12: memref<1x1xf32, #tpu.memory_space<vmem>>) attributes {dimension_semantics = [#tpu.dimension_semantics<arbitrary>], iteration_bounds = array<i64: 2>, scalar_prefetch = 0 : i64, scratch_operands = 1 : i64, tpu.core_type = #tpu.core_type<tc>, window_params = [{transform_indices = @transform_0, window_bounds = array<i64: 128, 4>}, {transform_indices = @transform_1, window_bounds = array<i64: 128, 4>}, {pipeline_mode = #tpu.pipeline_mode<synchronous>, transform_indices = @transform_2, window_bounds = array<i64: 4, 128>}, {pipeline_mode = #tpu.pipeline_mode<synchronous>, transform_indices = @transform_3, window_bounds = array<i64: 4, 128>}, {pipeline_mode = #tpu.pipeline_mode<synchronous>, transform_indices = @transform_4, window_bounds = array<i64: 1, 128>}, {pipeline_mode = #tpu.pipeline_mode<synchronous>, transform_indices = @transform_5, window_bounds = array<i64: 128, 128>}, {pipeline_mode = #tpu.pipeline_mode<synchronous>, transform_indices = @transform_6, window_bounds = array<i64: 1, 128>}, {pipeline_mode = #tpu.pipeline_mode<synchronous>, transform_indices = @transform_7, window_bounds = array<i64: 128, 4>}, {pipeline_mode = #tpu.pipeline_mode<synchronous>, transform_indices = @transform_8, window_bounds = array<i64: 1, 4>}, {transform_indices = @transform_9, window_bounds = array<i64: 128, 4>}, {pipeline_mode = #tpu.pipeline_mode<synchronous>, transform_indices = @transform_10, window_bounds = array<i64: 1, 1>}]} {
    %c0_i32 = arith.constant 0 : i32
    %0 = arith.cmpi eq, %arg0, %c0_i32 : i32
    %1 = arith.extui %0 : i1 to i32
    %c0_i32_0 = arith.constant 0 : i32
    %2 = arith.cmpi ne, %1, %c0_i32_0 : i32
    scf.if %2 {
      %cst_32 = arith.constant 0.000000e+00 : f32
      %49 = vector.broadcast %cst_32 : f32 to vector<1x1xf32>
      %c0_33 = arith.constant 0 : index
      %c0_34 = arith.constant 0 : index
      %50 = vector.load %arg12[%c0_33, %c0_34] : memref<1x1xf32, #tpu.memory_space<vmem>>, vector<1x1xf32>
      tpu.vector_store %arg12[%c0_33, %c0_34], %49 {strides = array<i32>} : memref<1x1xf32, #tpu.memory_space<vmem>>, vector<1x1xf32>,
    } else {
    }
    %c0 = arith.constant 0 : index
    %c0_1 = arith.constant 0 : index
    %3 = vector.load %arg1[%c0, %c0_1] : memref<128x4xf32, #tpu.memory_space<vmem>>, vector<128x4xf32>
    %c0_2 = arith.constant 0 : index
    %c0_3 = arith.constant 0 : index
    %4 = vector.load %arg3[%c0_2, %c0_3] : memref<4x128xf32, #tpu.memory_space<vmem>>, vector<4x128xf32>
    %cst = arith.constant dense<0.000000e+00> : vector<128x128xf32>
    %5 = tpu.matmul %3, %4, %cst {dimension_numbers = #tpu.dot_dimension_numbers<[1], [0], [0], [1], [0, 0, 1, 1], [], []>} : vector<128x4xf32>, vector<4x128xf32>, vector<128x128xf32> -> vector<128x128xf32>
    %c0_4 = arith.constant 0 : index
    %c0_5 = arith.constant 0 : index
    %6 = vector.load %arg2[%c0_4, %c0_5] : memref<128x4xf32, #tpu.memory_space<vmem>>, vector<128x4xf32>
    %c0_6 = arith.constant 0 : index
    %c0_7 = arith.constant 0 : index
    %7 = vector.load %arg4[%c0_6, %c0_7] : memref<4x128xf32, #tpu.memory_space<vmem>>, vector<4x128xf32>
    %cst_8 = arith.constant dense<0.000000e+00> : vector<128x128xf32>
    %8 = tpu.matmul %6, %7, %cst_8 {dimension_numbers = #tpu.dot_dimension_numbers<[1], [0], [0], [1], [0, 0, 1, 1], [], []>} : vector<128x4xf32>, vector<4x128xf32>, vector<128x128xf32> -> vector<128x128xf32>
    %9 = arith.addf %5, %8 : vector<128x128xf32>
    %c0_9 = arith.constant 0 : index
    %c0_10 = arith.constant 0 : index
    %10 = vector.load %arg5[%c0_9, %c0_10] : memref<1x128xf32, #tpu.memory_space<vmem>>, vector<1x128xf32>
    %11 = vector.broadcast %10 : vector<1x128xf32> to vector<128x128xf32>
    %12 = arith.addf %9, %11 : vector<128x128xf32>
    %cst_11 = arith.constant 0.000000e+00 : f32
    %13 = vector.broadcast %cst_11 : f32 to vector<128x128xf32>
    %14 = arith.maximumf %12, %13 : vector<128x128xf32>
    %c0_12 = arith.constant 0 : index
    %c0_13 = arith.constant 0 : index
    %15 = vector.load %arg6[%c0_12, %c0_13] : memref<128x128xf32, #tpu.memory_space<vmem>>, vector<128x128xf32>
    %cst_14 = arith.constant dense<0.000000e+00> : vector<128x128xf32>
    %16 = tpu.matmul %14, %15, %cst_14 {dimension_numbers = #tpu.dot_dimension_numbers<[1], [0], [0], [1], [0, 0, 1, 1], [], []>} : vector<128x128xf32>, vector<128x128xf32>, vector<128x128xf32> -> vector<128x128xf32>
    %c0_15 = arith.constant 0 : index
    %c0_16 = arith.constant 0 : index
    %17 = vector.load %arg7[%c0_15, %c0_16] : memref<1x128xf32, #tpu.memory_space<vmem>>, vector<1x128xf32>
    %18 = vector.broadcast %17 : vector<1x128xf32> to vector<128x128xf32>
    %19 = arith.addf %16, %18 : vector<128x128xf32>
    %cst_17 = arith.constant 0.000000e+00 : f32
    %20 = vector.broadcast %cst_17 : f32 to vector<128x128xf32>
    %21 = arith.maximumf %19, %20 : vector<128x128xf32>
    %c0_18 = arith.constant 0 : index
    %c0_19 = arith.constant 0 : index
    %22 = vector.load %arg8[%c0_18, %c0_19] : memref<128x4xf32, #tpu.memory_space<vmem>>, vector<128x4xf32>
    %cst_20 = arith.constant dense<0.000000e+00> : vector<128x4xf32>
    %23 = tpu.matmul %21, %22, %cst_20 {dimension_numbers = #tpu.dot_dimension_numbers<[1], [0], [0], [1], [0, 0, 1, 1], [], []>} : vector<128x128xf32>, vector<128x4xf32>, vector<128x4xf32> -> vector<128x4xf32>
    %c0_21 = arith.constant 0 : index
    %c0_22 = arith.constant 0 : index
    %24 = vector.load %arg9[%c0_21, %c0_22] : memref<1x4xf32, #tpu.memory_space<vmem>>, vector<1x4xf32>
    %25 = vector.broadcast %24 : vector<1x4xf32> to vector<128x4xf32>
    %26 = arith.addf %23, %25 : vector<128x4xf32>
    %c0_23 = arith.constant 0 : index
    %c0_24 = arith.constant 0 : index
    %27 = vector.load %arg10[%c0_23, %c0_24] : memref<128x4xf32, #tpu.memory_space<vmem>>, vector<128x4xf32>
    %28 = arith.subf %26, %27 : vector<128x4xf32>
    %29 = arith.mulf %28, %28 : vector<128x4xf32>
    %c128_i32 = arith.constant 128 : i32
    %30 = arith.muli %arg0, %c128_i32 : i32
    %31 = tpu.iota {dimensions = array<i32: 0>} : vector<128x4xi32>
    %32 = vector.broadcast %30 : i32 to vector<128x4xi32>
    %33 = arith.addi %32, %31 : vector<128x4xi32>
    %c200_i32 = arith.constant 200 : i32
    %34 = vector.broadcast %c200_i32 : i32 to vector<128x4xi32>
    %35 = arith.cmpi slt, %33, %34 : vector<128x4xi32>
    %cst_25 = arith.constant 0.000000e+00 : f32
    %36 = vector.broadcast %cst_25 : f32 to vector<128x4xf32>
    %37 = arith.select %35, %29, %36 : vector<128x4xi1>, vector<128x4xf32>
    %c0_26 = arith.constant 0 : index
    %c0_27 = arith.constant 0 : index
    %38 = vector.load %arg12[%c0_26, %c0_27] : memref<1x1xf32, #tpu.memory_space<vmem>>, vector<1x1xf32>
    %39 = vector.shape_cast %37 : vector<128x4xf32> to vector<1x128x4xf32>
    %cst_28 = arith.constant dense<0.000000e+00> : vector<1xf32>
    %40 = vector.multi_reduction <add>, %39, %cst_28 [1, 2] : vector<1x128x4xf32> to vector<1xf32>
    %41 = vector.shape_cast %40 : vector<1xf32> to vector<1x1x1xf32>
    %42 = vector.extract %41[0, 0, 0] : f32 from vector<1x1x1xf32>
    %43 = vector.broadcast %42 : f32 to vector<1x1xf32>
    %44 = arith.addf %38, %43 : vector<1x1xf32>
    %c0_29 = arith.constant 0 : index
    %c0_30 = arith.constant 0 : index
    %45 = vector.load %arg12[%c0_29, %c0_30] : memref<1x1xf32, #tpu.memory_space<vmem>>, vector<1x1xf32>
    tpu.vector_store %arg12[%c0_29, %c0_30], %44 {strides = array<i32>} : memref<1x1xf32, #tpu.memory_space<vmem>>, vector<1x1xf32>,
    %c1_i32 = arith.constant 1 : i32
    %46 = arith.cmpi eq, %arg0, %c1_i32 : i32
    %47 = arith.extui %46 : i1 to i32
    %c0_i32_31 = arith.constant 0 : i32
    %48 = arith.cmpi ne, %47, %c0_i32_31 : i32
    scf.if %48 {
      %c0_32 = arith.constant 0 : index
      %c0_33 = arith.constant 0 : index
      %49 = vector.load %arg12[%c0_32, %c0_33] : memref<1x1xf32, #tpu.memory_space<vmem>>, vector<1x1xf32>
      %cst_34 = arith.constant 1.250000e-03 : f32
      %50 = vector.broadcast %cst_34 : f32 to vector<1x1xf32>
      %51 = arith.mulf %49, %50 : vector<1x1xf32>
      %c0_35 = arith.constant 0 : index
      %c0_36 = arith.constant 0 : index
      %52 = vector.load %arg11[%c0_35, %c0_36] : memref<1x1xf32, #tpu.memory_space<vmem>>, vector<1x1xf32>
      tpu.vector_store %arg11[%c0_35, %c0_36], %51 {strides = array<i32>} : memref<1x1xf32, #tpu.memory_space<vmem>>, vector<1x1xf32>,
    } else {
    }
    return
  }
  func.func @transform_0(%arg0: i32) -> (i32, i32) {
    %c0_i32 = arith.constant 0 : i32
    %c0_i32_0 = arith.constant 0 : i32
    return %arg0, %c0_i32 : i32, i32
  }
  func.func @transform_1(%arg0: i32) -> (i32, i32) {
    %c0_i32 = arith.constant 0 : i32
    %c0_i32_0 = arith.constant 0 : i32
    return %arg0, %c0_i32 : i32, i32
  }
  func.func @transform_2(%arg0: i32) -> (i32, i32) {
    %c0_i32 = arith.constant 0 : i32
    %c0_i32_0 = arith.constant 0 : i32
    %c0_i32_1 = arith.constant 0 : i32
    return %c0_i32, %c0_i32_0 : i32, i32
  }
  func.func @transform_3(%arg0: i32) -> (i32, i32) {
    %c0_i32 = arith.constant 0 : i32
    %c0_i32_0 = arith.constant 0 : i32
    %c0_i32_1 = arith.constant 0 : i32
    return %c0_i32, %c0_i32_0 : i32, i32
  }
  func.func @transform_4(%arg0: i32) -> (i32, i32) {
    %c0_i32 = arith.constant 0 : i32
    %c0_i32_0 = arith.constant 0 : i32
    %c0_i32_1 = arith.constant 0 : i32
    return %c0_i32, %c0_i32_0 : i32, i32
  }
  func.func @transform_5(%arg0: i32) -> (i32, i32) {
    %c0_i32 = arith.constant 0 : i32
    %c0_i32_0 = arith.constant 0 : i32
    %c0_i32_1 = arith.constant 0 : i32
    return %c0_i32, %c0_i32_0 : i32, i32
  }
  func.func @transform_6(%arg0: i32) -> (i32, i32) {
    %c0_i32 = arith.constant 0 : i32
    %c0_i32_0 = arith.constant 0 : i32
    %c0_i32_1 = arith.constant 0 : i32
    return %c0_i32, %c0_i32_0 : i32, i32
  }
  func.func @transform_7(%arg0: i32) -> (i32, i32) {
    %c0_i32 = arith.constant 0 : i32
    %c0_i32_0 = arith.constant 0 : i32
    %c0_i32_1 = arith.constant 0 : i32
    return %c0_i32, %c0_i32_0 : i32, i32
  }
  func.func @transform_8(%arg0: i32) -> (i32, i32) {
    %c0_i32 = arith.constant 0 : i32
    %c0_i32_0 = arith.constant 0 : i32
    %c0_i32_1 = arith.constant 0 : i32
    return %c0_i32, %c0_i32_0 : i32, i32
  }
  func.func @transform_9(%arg0: i32) -> (i32, i32) {
    %c0_i32 = arith.constant 0 : i32
    %c0_i32_0 = arith.constant 0 : i32
    return %arg0, %c0_i32 : i32, i32
  }
  func.func @transform_10(%arg0: i32) -> (i32, i32) {
    %c0_i32 = arith.constant 0 : i32
    %c0_i32_0 = arith.constant 0 : i32
    %c0_i32_1 = arith.constant 0 : i32
    return %c0_i32, %c0_i32_0 : i32, i32
  }
}

</mosaic_0001>

<llo_original>
// kernel: tpu_custom_call.1
$region0: #{tpu_custom_call.1}
  #allocation0 [shape = 'u32[]', space=smem, size = 0x4, offset = 0x4, fixed_abs, tag = 'smem constant byte address 0x4 - core index']
  #allocation1 [shape = 'u32[144,128]{1,0:T(1,128)}', space=vmem, size = 0x12000, scoped, tag = 'internal scratch']
  #allocation2 [shape = 'f32[1,1]{1,0:T(1,128)}', space=vmem, size = 0x200, scoped, tag = 'scratch operand']
  %s0 = inlined_call_operand.vmem [shape: f32[256,4], index: 0, kind: input, shape index: {}]
  %s1 = inlined_call_operand.vmem [shape: f32[256,4], index: 1, kind: input, shape index: {}]
  %s2 = inlined_call_operand.vmem [shape: f32[4,128], index: 2, kind: input, shape index: {}]
  %s3 = inlined_call_operand.vmem [shape: f32[4,128], index: 3, kind: input, shape index: {}]
  %s4 = inlined_call_operand.vmem [shape: f32[1,128], index: 4, kind: input, shape index: {}]
  %s5 = inlined_call_operand.vmem [shape: f32[128,128], index: 5, kind: input, shape index: {}]
  %s6 = inlined_call_operand.vmem [shape: f32[1,128], index: 6, kind: input, shape index: {}]
  %s7 = inlined_call_operand.vmem [shape: f32[128,4], index: 7, kind: input, shape index: {}]
  %s8 = inlined_call_operand.vmem [shape: f32[1,4], index: 8, kind: input, shape index: {}]
  %s9 = inlined_call_operand.vmem [shape: f32[256,4], index: 9, kind: input, shape index: {}]
  %s10 = inlined_call_operand.hbm [shape: f32[1,1], index: 10, kind: output, shape index: {}]
  %s11 = sld [smem:[#allocation0]]
  $region81: #{tpu_custom_call.1} parent=0
    _
  %s13 = ssub.s32 1, %s11
  %s14 = scalar_select 0, %s13, %s11
  $region1: #{tpu_custom_call.1} parent=0
    #allocation3 [shape = 'u8[512]{0}', space=vmem, size = 0x400, scoped, tag = 'output window, operand 0, single buffered']
    #allocation4 [shape = 's32[2]{0}', space=sflag, size = 0x8, scoped, tag = 'scoped memory for tpu_custom_call.1']
    %15 = vsyncpa [#allocation4], 0
    loop: start=0, step=1, limit=4
    $region2: #{tpu_custom_call.1} parent=1 // loop_pre_header
      _
    $region3: #{tpu_custom_call.1} parent=1 // loop_header
      %s17 = sphi 0, %s21
      %p18 = scmp.ge.s32.totalorder %s17, 4
      %s27 = sphi 0, %s29
      %s30 = sphi 0, %s27
      %s31 = sphi 0, %s30
      %s47 = sphi 0, %s31
      %s53 = sphi 0, %s55
      %s56 = sphi 0, %s53
      %s57 = sphi 0, %s56
      %s73 = sphi 0, %s57
      %s77 = sphi 0, %s77
      %s79 = sphi 0, %s77
      %s80 = sphi 0, %s79
      %s94 = sphi 0, %s80
      %s98 = sphi 0, %s98
      %s100 = sphi 0, %s98
      %s101 = sphi 0, %s100
      %s115 = sphi 0, %s101
      %s119 = sphi 0, %s119
      %s121 = sphi 0, %s119
      %s122 = sphi 0, %s121
      %s136 = sphi 0, %s122
      %s140 = sphi 0, %s140
      %s142 = sphi 0, %s140
      %s143 = sphi 0, %s142
      %s157 = sphi 0, %s143
      %s161 = sphi 0, %s161
      %s163 = sphi 0, %s161
      %s164 = sphi 0, %s163
      %s178 = sphi 0, %s164
      %s182 = sphi 0, %s182
      %s184 = sphi 0, %s182
      %s185 = sphi 0, %s184
      %s199 = sphi 0, %s185
      %s203 = sphi 0, %s203
      %s205 = sphi 0, %s203
      %s206 = sphi 0, %s205
      %s220 = sphi 0, %s206
      %s226 = sphi 0, %s228
      %s229 = sphi 0, %s226
      %s230 = sphi 0, %s229
      %s246 = sphi 0, %s230
      %s250 = sphi 0, %s250
      %s252 = sphi 0, %s250
      %s253 = sphi 0, %s252
      %s267 = sphi 0, %s253
    $region4: #{tpu_custom_call.1} parent=1 // loop_header_branch
      %20 = sbr.rel (%p18) target = $region8
    $region5: #{tpu_custom_call.1} parent=1 // loop_body
      %s22 = ssub.s32 %s17, 1
      %s23 = ssub.s32 %s17, 2
      %s24 = sadd.s32 %s17, 1
      %s25 = ssub.s32 %s17, %s24
      %p26 = scmp.eq.s32.totalorder %s25, 0
      %s28 = sadd.s32 %s27, 1
      %s29 = scalar_select %p26, %s27, %s28
      %p32 = pneg %p26
      %p33 = scmp.eq.s32.totalorder %s17, 1
      %p34 = por %p32, %p33
      %p35 = scmp.ne.s32.totalorder %s27, %s30
      %p36 = scmp.eq.s32.totalorder %s17, 0
      %p37 = por %p35, %p36
      %p38 = scmp.ne.s32.totalorder %s27, %s30
      %p39 = scmp.eq.s32.totalorder %s22, 1
      %p40 = por %p38, %p39
      %p41 = scmp.ne.s32.totalorder %s30, %s31
      %p42 = scmp.eq.s32.totalorder %s22, 0
      %p43 = por %p41, %p42
      %p44 = scmp.ne.s32.totalorder %s30, %s31
      %p45 = scmp.eq.s32.totalorder %s23, 1
      %p46 = por %p44, %p45
      %p48 = scmp.ne.s32.totalorder %s31, %s47
      %p49 = scmp.eq.s32.totalorder %s23, 0
      %p50 = por %p48, %p49
      %s51 = ssub.s32 %s17, %s24
      %p52 = scmp.eq.s32.totalorder %s51, 0
      %s54 = sadd.s32 %s53, 1
      %s55 = scalar_select %p52, %s53, %s54
      %p58 = pneg %p52
      %p59 = scmp.eq.s32.totalorder %s17, 1
      %p60 = por %p58, %p59
      %p61 = scmp.ne.s32.totalorder %s53, %s56
      %p62 = scmp.eq.s32.totalorder %s17, 0
      %p63 = por %p61, %p62
      %p64 = scmp.ne.s32.totalorder %s53, %s56
      %p65 = scmp.eq.s32.totalorder %s22, 1
      %p66 = por %p64, %p65
      %p67 = scmp.ne.s32.totalorder %s56, %s57
      %p68 = scmp.eq.s32.totalorder %s22, 0
      %p69 = por %p67, %p68
      %p70 = scmp.ne.s32.totalorder %s56, %s57
      %p71 = scmp.eq.s32.totalorder %s23, 1
      %p72 = por %p70, %p71
      %p74 = scmp.ne.s32.totalorder %s57, %s73
      %p75 = scmp.eq.s32.totalorder %s23, 0
      %p76 = por %p74, %p75
      %s78 = sadd.s32 %s77, 1
      %p81 = scmp.eq.s32.totalorder %s17, 1
      %p82 = scmp.ne.s32.totalorder %s77, %s79
      %p83 = scmp.eq.s32.totalorder %s17, 0
      %p84 = por %p82, %p83
      %p85 = scmp.ne.s32.totalorder %s77, %s79
      %p86 = scmp.eq.s32.totalorder %s22, 1
      %p87 = por %p85, %p86
      %p88 = scmp.ne.s32.totalorder %s79, %s80
      %p89 = scmp.eq.s32.totalorder %s22, 0
      %p90 = por %p88, %p89
      %p91 = scmp.ne.s32.totalorder %s79, %s80
      %p92 = scmp.eq.s32.totalorder %s23, 1
      %p93 = por %p91, %p92
      %p95 = scmp.ne.s32.totalorder %s80, %s94
      %p96 = scmp.eq.s32.totalorder %s23, 0
      %p97 = por %p95, %p96
      %s99 = sadd.s32 %s98, 1
      %p102 = scmp.eq.s32.totalorder %s17, 1
      %p103 = scmp.ne.s32.totalorder %s98, %s100
      %p104 = scmp.eq.s32.totalorder %s17, 0
      %p105 = por %p103, %p104
      %p106 = scmp.ne.s32.totalorder %s98, %s100
      %p107 = scmp.eq.s32.totalorder %s22, 1
      %p108 = por %p106, %p107
      %p109 = scmp.ne.s32.totalorder %s100, %s101
      %p110 = scmp.eq.s32.totalorder %s22, 0
      %p111 = por %p109, %p110
      %p112 = scmp.ne.s32.totalorder %s100, %s101
      %p113 = scmp.eq.s32.totalorder %s23, 1
      %p114 = por %p112, %p113
      %p116 = scmp.ne.s32.totalorder %s101, %s115
      %p117 = scmp.eq.s32.totalorder %s23, 0
      %p118 = por %p116, %p117
      %s120 = sadd.s32 %s119, 1
      %p123 = scmp.eq.s32.totalorder %s17, 1
      %p124 = scmp.ne.s32.totalorder %s119, %s121
      %p125 = scmp.eq.s32.totalorder %s17, 0
      %p126 = por %p124, %p125
      %p127 = scmp.ne.s32.totalorder %s119, %s121
      %p128 = scmp.eq.s32.totalorder %s22, 1
      %p129 = por %p127, %p128
      %p130 = scmp.ne.s32.totalorder %s121, %s122
      %p131 = scmp.eq.s32.totalorder %s22, 0
      %p132 = por %p130, %p131
      %p133 = scmp.ne.s32.totalorder %s121, %s122
      %p134 = scmp.eq.s32.totalorder %s23, 1
      %p135 = por %p133, %p134
      %p137 = scmp.ne.s32.totalorder %s122, %s136
      %p138 = scmp.eq.s32.totalorder %s23, 0
      %p139 = por %p137, %p138
      %s141 = sadd.s32 %s140, 1
      %p144 = scmp.eq.s32.totalorder %s17, 1
      %p145 = scmp.ne.s32.totalorder %s140, %s142
      %p146 = scmp.eq.s32.totalorder %s17, 0
      %p147 = por %p145, %p146
      %p148 = scmp.ne.s32.totalorder %s140, %s142
      %p149 = scmp.eq.s32.totalorder %s22, 1
      %p150 = por %p148, %p149
      %p151 = scmp.ne.s32.totalorder %s142, %s143
      %p152 = scmp.eq.s32.totalorder %s22, 0
      %p153 = por %p151, %p152
      %p154 = scmp.ne.s32.totalorder %s142, %s143
      %p155 = scmp.eq.s32.totalorder %s23, 1
      %p156 = por %p154, %p155
      %p158 = scmp.ne.s32.totalorder %s143, %s157
      %p159 = scmp.eq.s32.totalorder %s23, 0
      %p160 = por %p158, %p159
      %s162 = sadd.s32 %s161, 1
      %p165 = scmp.eq.s32.totalorder %s17, 1
      %p166 = scmp.ne.s32.totalorder %s161, %s163
      %p167 = scmp.eq.s32.totalorder %s17, 0
      %p168 = por %p166, %p167
      %p169 = scmp.ne.s32.totalorder %s161, %s163
      %p170 = scmp.eq.s32.totalorder %s22, 1
      %p171 = por %p169, %p170
      %p172 = scmp.ne.s32.totalorder %s163, %s164
      %p173 = scmp.eq.s32.totalorder %s22, 0
      %p174 = por %p172, %p173
      %p175 = scmp.ne.s32.totalorder %s163, %s164
      %p176 = scmp.eq.s32.totalorder %s23, 1
      %p177 = por %p175, %p176
      %p179 = scmp.ne.s32.totalorder %s164, %s178
      %p180 = scmp.eq.s32.totalorder %s23, 0
      %p181 = por %p179, %p180
      %s183 = sadd.s32 %s182, 1
      %p186 = scmp.eq.s32.totalorder %s17, 1
      %p187 = scmp.ne.s32.totalorder %s182, %s184
      %p188 = scmp.eq.s32.totalorder %s17, 0
      %p189 = por %p187, %p188
      %p190 = scmp.ne.s32.totalorder %s182, %s184
      %p191 = scmp.eq.s32.totalorder %s22, 1
      %p192 = por %p190, %p191
      %p193 = scmp.ne.s32.totalorder %s184, %s185
      %p194 = scmp.eq.s32.totalorder %s22, 0
      %p195 = por %p193, %p194
      %p196 = scmp.ne.s32.totalorder %s184, %s185
      %p197 = scmp.eq.s32.totalorder %s23, 1
      %p198 = por %p196, %p197
      %p200 = scmp.ne.s32.totalorder %s185, %s199
      %p201 = scmp.eq.s32.totalorder %s23, 0
      %p202 = por %p200, %p201
      %s204 = sadd.s32 %s203, 1
      %p207 = scmp.eq.s32.totalorder %s17, 1
      %p208 = scmp.ne.s32.totalorder %s203, %s205
      %p209 = scmp.eq.s32.totalorder %s17, 0
      %p210 = por %p208, %p209
      %p211 = scmp.ne.s32.totalorder %s203, %s205
      %p212 = scmp.eq.s32.totalorder %s22, 1
      %p213 = por %p211, %p212
      %p214 = scmp.ne.s32.totalorder %s205, %s206
      %p215 = scmp.eq.s32.totalorder %s22, 0
      %p216 = por %p214, %p215
      %p217 = scmp.ne.s32.totalorder %s205, %s206
      %p218 = scmp.eq.s32.totalorder %s23, 1
      %p219 = por %p217, %p218
      %p221 = scmp.ne.s32.totalorder %s206, %s220
      %p222 = scmp.eq.s32.totalorder %s23, 0
      %p223 = por %p221, %p222
      %s224 = ssub.s32 %s17, %s24
      %p225 = scmp.eq.s32.totalorder %s224, 0
      %s227 = sadd.s32 %s226, 1
      %s228 = scalar_select %p225, %s226, %s227
      %p231 = pneg %p225
      %p232 = scmp.eq.s32.totalorder %s17, 1
      %p233 = por %p231, %p232
      %p234 = scmp.ne.s32.totalorder %s226, %s229
      %p235 = scmp.eq.s32.totalorder %s17, 0
      %p236 = por %p234, %p235
      %p237 = scmp.ne.s32.totalorder %s226, %s229
      %p238 = scmp.eq.s32.totalorder %s22, 1
      %p239 = por %p237, %p238
      %p240 = scmp.ne.s32.totalorder %s229, %s230
      %p241 = scmp.eq.s32.totalorder %s22, 0
      %p242 = por %p240, %p241
      %p243 = scmp.ne.s32.totalorder %s229, %s230
      %p244 = scmp.eq.s32.totalorder %s23, 1
      %p245 = por %p243, %p244
      %p247 = scmp.ne.s32.totalorder %s230, %s246
      %p248 = scmp.eq.s32.totalorder %s23, 0
      %p249 = por %p247, %p248
      %s251 = sadd.s32 %s250, 1
      %p254 = scmp.eq.s32.totalorder %s17, 1
      %p255 = scmp.ne.s32.totalorder %s250, %s252
      %p256 = scmp.eq.s32.totalorder %s17, 0
      %p257 = por %p255, %p256
      %p258 = scmp.ne.s32.totalorder %s250, %s252
      %p259 = scmp.eq.s32.totalorder %s22, 1
      %p260 = por %p258, %p259
      %p261 = scmp.ne.s32.totalorder %s252, %s253
      %p262 = scmp.eq.s32.totalorder %s22, 0
      %p263 = por %p261, %p262
      %p264 = scmp.ne.s32.totalorder %s252, %s253
      %p265 = scmp.eq.s32.totalorder %s23, 1
      %p266 = por %p264, %p265
      %p268 = scmp.ne.s32.totalorder %s253, %s267
      %p269 = scmp.eq.s32.totalorder %s23, 0
      %p270 = por %p268, %p269
      %p271 = scmp.le.s32.totalorder 1, %s17
      %p272 = scmp.lt.s32.totalorder %s17, 3
      %p273 = pnand %p271, %p272
      %p274 = pneg %p273
      // Predicated region
      $region9: #{tpu_custom_call.1} parent=5 // pred_check
        _
      $region10: #{tpu_custom_call.1} parent=5 // pred_check_branch
        %276 = sbr.rel (%p273) target = $region12
      $region11: #{tpu_custom_call.1} parent=5 // pred_region
        %s277 = ssub.s32 %s17, 1
        // Predicated region
        $region13: #{tpu_custom_call.1} parent=11 // pred_check
          %p278 = pneg %p90
        $region14: #{tpu_custom_call.1} parent=11 // pred_check_branch
          %280 = sbr.rel (%p278) target = $region16
        $region15: #{tpu_custom_call.1} parent=11 // pred_region
          _
        $region16: #{tpu_custom_call.1} parent=11 // pred_fallthru
          _
        // Predicated region
        $region17: #{tpu_custom_call.1} parent=11 // pred_check
          %p281 = pneg %p111
        $region18: #{tpu_custom_call.1} parent=11 // pred_check_branch
          %283 = sbr.rel (%p281) target = $region20
        $region19: #{tpu_custom_call.1} parent=11 // pred_region
          _
        $region20: #{tpu_custom_call.1} parent=11 // pred_fallthru
          _
        // Predicated region
        $region21: #{tpu_custom_call.1} parent=11 // pred_check
          %p284 = pneg %p132
        $region22: #{tpu_custom_call.1} parent=11 // pred_check_branch
          %286 = sbr.rel (%p284) target = $region24
        $region23: #{tpu_custom_call.1} parent=11 // pred_region
          _
        $region24: #{tpu_custom_call.1} parent=11 // pred_fallthru
          _
        // Predicated region
        $region25: #{tpu_custom_call.1} parent=11 // pred_check
          %p287 = pneg %p153
        $region26: #{tpu_custom_call.1} parent=11 // pred_check_branch
          %289 = sbr.rel (%p287) target = $region28
        $region27: #{tpu_custom_call.1} parent=11 // pred_region
          _
        $region28: #{tpu_custom_call.1} parent=11 // pred_fallthru
          _
        // Predicated region
        $region29: #{tpu_custom_call.1} parent=11 // pred_check
          %p290 = pneg %p174
        $region30: #{tpu_custom_call.1} parent=11 // pred_check_branch
          %292 = sbr.rel (%p290) target = $region32
        $region31: #{tpu_custom_call.1} parent=11 // pred_region
          _
        $region32: #{tpu_custom_call.1} parent=11 // pred_fallthru
          _
        // Predicated region
        $region33: #{tpu_custom_call.1} parent=11 // pred_check
          %p293 = pneg %p195
        $region34: #{tpu_custom_call.1} parent=11 // pred_check_branch
          %295 = sbr.rel (%p293) target = $region36
        $region35: #{tpu_custom_call.1} parent=11 // pred_region
          _
        $region36: #{tpu_custom_call.1} parent=11 // pred_fallthru
          _
        // Predicated region
        $region37: #{tpu_custom_call.1} parent=11 // pred_check
          %p296 = pneg %p216
        $region38: #{tpu_custom_call.1} parent=11 // pred_check_branch
          %298 = sbr.rel (%p296) target = $region40
        $region39: #{tpu_custom_call.1} parent=11 // pred_region
          _
        $region40: #{tpu_custom_call.1} parent=11 // pred_fallthru
          _
      $region12: #{tpu_custom_call.1} parent=5 // pred_fallthru
        _
      %p299 = scmp.lt.s32.totalorder %s17, 2
      // Predicated region
      $region41: #{tpu_custom_call.1} parent=5 // pred_check
        %p300 = pneg %p299
      $region42: #{tpu_custom_call.1} parent=5 // pred_check_branch
        %302 = sbr.rel (%p300) target = $region44
      $region43: #{tpu_custom_call.1} parent=5 // pred_region
        // Predicated region
        $region45: #{tpu_custom_call.1} parent=43 // pred_check
          %p303 = pneg %p37
        $region46: #{tpu_custom_call.1} parent=43 // pred_check_branch
          %305 = sbr.rel (%p303) target = $region48
        $region47: #{tpu_custom_call.1} parent=43 // pred_region
          %s306 = smul.u32 16, %s17
          %p307 = scmp.lt.s32.totalorder %s306, 31
          %s308 = scalar_select %p307, %s306, 31
          %s309 = smul.addr %s308, 8
          %s310 = scalar_lea.vmem %s0, %s309
          %s311 = smul.u32 16, %s17
        $region48: #{tpu_custom_call.1} parent=43 // pred_fallthru
          _
        // Predicated region
        $region49: #{tpu_custom_call.1} parent=43 // pred_check
          %p312 = pneg %p63
        $region50: #{tpu_custom_call.1} parent=43 // pred_check_branch
          %314 = sbr.rel (%p312) target = $region52
        $region51: #{tpu_custom_call.1} parent=43 // pred_region
          %s315 = smul.u32 16, %s17
          %p316 = scmp.lt.s32.totalorder %s315, 31
          %s317 = scalar_select %p316, %s315, 31
          %s318 = smul.addr %s317, 8
          %s319 = scalar_lea.vmem %s1, %s318
          %s320 = smul.u32 16, %s17
        $region52: #{tpu_custom_call.1} parent=43 // pred_fallthru
          _
        // Predicated region
        $region53: #{tpu_custom_call.1} parent=43 // pred_check
          %p321 = pneg %p236
        $region54: #{tpu_custom_call.1} parent=43 // pred_check_branch
          %323 = sbr.rel (%p321) target = $region56
        $region55: #{tpu_custom_call.1} parent=43 // pred_region
          %s324 = smul.u32 16, %s17
          %p325 = scmp.lt.s32.totalorder %s324, 31
          %s326 = scalar_select %p325, %s324, 31
          %s327 = smul.addr %s326, 8
          %s328 = scalar_lea.vmem %s9, %s327
          %s329 = smul.u32 16, %s17
        $region56: #{tpu_custom_call.1} parent=43 // pred_fallthru
          _
      $region44: #{tpu_custom_call.1} parent=5 // pred_fallthru
        _
      %p330 = scmp.le.s32.totalorder 1, %s17
      %p331 = scmp.lt.s32.totalorder %s17, 3
      %p332 = pnand %p330, %p331
      %p333 = pneg %p332
      // Predicated region
      $region57: #{tpu_custom_call.1} parent=5 // pred_check
        _
      $region58: #{tpu_custom_call.1} parent=5 // pred_check_branch
        %335 = sbr.rel (%p332) target = $region60
      $region59: #{tpu_custom_call.1} parent=5 // pred_region
        %s336 = ssub.s32 %s17, 1
        %s337 = smul.u32 16, %s22
        %p338 = scmp.lt.s32.totalorder %s337, 31
        %s339 = scalar_select %p338, %s337, 31
        %s340 = smul.addr %s339, 8
        %s341 = scalar_lea.vmem %s0, %s340
        %p342 = pneg %p43
        %p343 = pneg %p40
        %s344 = smul.u32 16, %s22
        %p345 = scmp.lt.s32.totalorder %s344, 31
        %s346 = scalar_select %p345, %s344, 31
        %s347 = smul.addr %s346, 8
        %s348 = scalar_lea.vmem %s1, %s347
        %p349 = pneg %p69
        %p350 = pneg %p66
        %p351 = pneg %p90
        %p352 = pneg %p87
        %p353 = pneg %p111
        %p354 = pneg %p108
        %p355 = pneg %p132
        %p356 = pneg %p129
        %p357 = pneg %p153
        %p358 = pneg %p150
        %p359 = pneg %p174
        %p360 = pneg %p171
        %p361 = pneg %p195
        %p362 = pneg %p192
        %p363 = pneg %p216
        %p364 = pneg %p213
        %s365 = smul.u32 16, %s22
        %p366 = scmp.lt.s32.totalorder %s365, 31
        %s367 = scalar_select %p366, %s365, 31
        %s368 = smul.addr %s367, 8
        %s369 = scalar_lea.vmem %s9, %s368
        %p370 = pneg %p242
        %p371 = pneg %p239
        %p372 = pneg %p263
        %p373 = pneg %p260
        %s374 = smul.u32 16, %s22
        %p375 = scmp.lt.s32.totalorder %s374, 31
        %s376 = scalar_select %p375, %s374, 31
        %s377 = smul.addr %s376, 8
        %s378 = scalar_lea.vmem %s0, %s377
        %s379 = smul.u32 16, %s22
        %s380 = smul.u32 16, %s22
        %p381 = scmp.lt.s32.totalorder %s380, 31
        %s382 = scalar_select %p381, %s380, 31
        %s383 = smul.addr %s382, 8
        %s384 = scalar_lea.vmem %s1, %s383
        %s385 = smul.u32 16, %s22
        %s386 = smul.u32 16, %s22
        %p387 = scmp.lt.s32.totalorder %s386, 31
        %s388 = scalar_select %p387, %s386, 31
        %s389 = smul.addr %s388, 8
        %s390 = scalar_lea.vmem %s9, %s389
        %s391 = smul.u32 16, %s22
        %p392 = scmp.eq.s32.totalorder %s22, 0
        // Predicated region
        $region61: #{tpu_custom_call.1} parent=59 // pred_check
          %p393 = pneg %p392
        $region62: #{tpu_custom_call.1} parent=59 // pred_check_branch
          %395 = sbr.rel (%p393) target = $region64
        $region63: #{tpu_custom_call.1} parent=59 // pred_region
          %vm396 = vcmask 0
          %397 = vst.msk [vmem:[#allocation2] sm:$0x1] %vm396, 0.0
        $region64: #{tpu_custom_call.1} parent=59 // pred_fallthru
          _
        %v398 = vld [vmem:[%s378] sm:$0xff]
        %v399 = vld [vmem:[%s378 + $0x8] sm:$0xff]
        %v400 = vld [vmem:[%s378 + $0x10] sm:$0xff]
        %v401 = vld [vmem:[%s378 + $0x18] sm:$0xff]
        %v402 = vld [vmem:[%s378 + $0x20] sm:$0xff]
        %v403 = vld [vmem:[%s378 + $0x28] sm:$0xff]
        %v404 = vld [vmem:[%s378 + $0x30] sm:$0xff]
        %v405 = vld [vmem:[%s378 + $0x38] sm:$0xff]
        %v406 = vld [vmem:[%s378 + $0x40] sm:$0xff]
        %v407 = vld [vmem:[%s378 + $0x48] sm:$0xff]
        %v408 = vld [vmem:[%s378 + $0x50] sm:$0xff]
        %v409 = vld [vmem:[%s378 + $0x58] sm:$0xff]
        %v410 = vld [vmem:[%s378 + $0x60] sm:$0xff]
        %v411 = vld [vmem:[%s378 + $0x68] sm:$0xff]
        %v412 = vld [vmem:[%s378 + $0x70] sm:$0xff]
        %v413 = vld [vmem:[%s378 + $0x78] sm:$0xff]
        %v414 = vld [vmem:[%s2] sm:$0xf]
        %v415 = vld [vmem:[%s384] sm:$0xff]
        %v416 = vld [vmem:[%s384 + $0x8] sm:$0xff]
        %v417 = vld [vmem:[%s384 + $0x10] sm:$0xff]
        %v418 = vld [vmem:[%s384 + $0x18] sm:$0xff]
        %v419 = vld [vmem:[%s384 + $0x20] sm:$0xff]
        %v420 = vld [vmem:[%s384 + $0x28] sm:$0xff]
        %v421 = vld [vmem:[%s384 + $0x30] sm:$0xff]
        %v422 = vld [vmem:[%s384 + $0x38] sm:$0xff]
        %v423 = vld [vmem:[%s384 + $0x40] sm:$0xff]
        %v424 = vld [vmem:[%s384 + $0x48] sm:$0xff]
        %v425 = vld [vmem:[%s384 + $0x50] sm:$0xff]
        %v426 = vld [vmem:[%s384 + $0x58] sm:$0xff]
        %v427 = vld [vmem:[%s384 + $0x60] sm:$0xff]
        %v428 = vld [vmem:[%s384 + $0x68] sm:$0xff]
        %v429 = vld [vmem:[%s384 + $0x70] sm:$0xff]
        %v430 = vld [vmem:[%s384 + $0x78] sm:$0xff]
        %v431 = vld [vmem:[%s3] sm:$0xf]
        %vm432 = vcmask 31744
        %v434 = vsel %vm432, %v415, 0
        %v437 = vsel %vm432, %v416, 0
        %v440 = vsel %vm432, %v417, 0
        %v443 = vsel %vm432, %v418, 0
        %v446 = vsel %vm432, %v419, 0
        %v449 = vsel %vm432, %v420, 0
        %v452 = vsel %vm432, %v421, 0
        %v455 = vsel %vm432, %v422, 0
        %v458 = vsel %vm432, %v423, 0
        %v461 = vsel %vm432, %v424, 0
        %v464 = vsel %vm432, %v425, 0
        %v467 = vsel %vm432, %v426, 0
        %v470 = vsel %vm432, %v427, 0
        %v473 = vsel %vm432, %v428, 0
        %v476 = vsel %vm432, %v429, 0
        %v479 = vsel %vm432, %v430, 0
        %vm481 = vcmask 1043456
        %v483 = vsel %vm481, %v431, 0
        %485 = vmatprep.subr.mxu0 0.0
        %486 = vmatpush1.msra.mxu0 %v483
        %487 = vmatprep.subr.mxu0 0.0
        %488 = vmatpush1.msra.mxu0 0.0
        %489 = vmatprep.subr.mxu0 0.0
        %490 = vmatpush1.msra.mxu0 0.0
        %491 = vmatprep.subr.mxu0 0.0
        %492 = vmatpush1.msra.mxu0 0.0
        %493 = vmatprep.subr.mxu0 0.0
        %494 = vmatpush1.msra.mxu0 0.0
        %495 = vmatprep.subr.mxu0 0.0
        %496 = vmatpush1.msra.mxu0 0.0
        %497 = vmatprep.subr.mxu0 0.0
        %498 = vmatpush1.msra.mxu0 0.0
        %499 = vmatprep.subr.mxu0 0.0
        %500 = vmatpush1.msra.mxu0 0.0
        %501 = vmatprep.subr.mxu0 0.0
        %502 = vmatpush1.msra.mxu0 0.0
        %503 = vmatprep.subr.mxu0 0.0
        %504 = vmatpush1.msra.mxu0 0.0
        %505 = vmatprep.subr.mxu0 0.0
        %506 = vmatpush1.msra.mxu0 0.0
        %507 = vmatprep.subr.mxu0 0.0
        %508 = vmatpush1.msra.mxu0 0.0
        %509 = vmatprep.subr.mxu0 0.0
        %510 = vmatpush1.msra.mxu0 0.0
        %511 = vmatprep.subr.mxu0 0.0
        %512 = vmatpush1.msra.mxu0 0.0
        %513 = vmatprep.subr.mxu0 0.0
        %514 = vmatpush1.msra.mxu0 0.0
        %515 = vmatprep.subr.mxu0 0.0
        %516 = vmatpush1.msra.mxu0 0.0
        %517 = vmatprep.subr.mxu0 0.0
        %518 = vmatpush1.msra.mxu0 0.0
        %519 = vmatprep.subr.mxu0 0.0
        %520 = vmatpush1.msra.mxu0 0.0
        %521 = vmatprep.subr.mxu0 0.0
        %522 = vmatpush1.msra.mxu0 0.0
        %523 = vmatprep.subr.mxu0 0.0
        %524 = vmatpush1.msra.mxu0 0.0
        %525 = vmatprep.subr.mxu0 0.0
        %526 = vmatpush1.msra.mxu0 0.0
        %527 = vmatprep.subr.mxu0 0.0
        %528 = vmatpush1.msra.mxu0 0.0
        %529 = vmatprep.subr.mxu0 0.0
        %530 = vmatpush1.msra.mxu0 0.0
        %531 = vmatprep.subr.mxu0 0.0
        %532 = vmatpush1.msra.mxu0 0.0
        %533 = vmatprep.subr.mxu0 0.0
        %534 = vmatpush1.msra.mxu0 0.0
        %535 = vmatprep.subr.mxu0 0.0
        %536 = vmatpush1.msra.mxu0 0.0
        %537 = vmatprep.subr.mxu0 0.0
        %538 = vmatpush1.msra.mxu0 0.0
        %539 = vmatprep.subr.mxu0 0.0
        %540 = vmatpush1.msra.mxu0 0.0
        %541 = vmatprep.subr.mxu0 0.0
        %542 = vmatpush1.msra.mxu0 0.0
        %543 = vmatprep.subr.mxu0 0.0
        %544 = vmatpush1.msra.mxu0 0.0
        %545 = vmatprep.subr.mxu0 0.0
        %546 = vmatpush1.msra.mxu0 0.0
        %547 = vmatprep.subr.mxu0 0.0
        %548 = vmatpush1.msra.mxu0 0.0
        %549 = vmatprep.mubr.f32.mxu0 0.0
        %550 = vmatmul.mubr.f32.gmra.mrb[0].mxu0 %v434
        %v551 = vpop.f32.mrb[0].mxu0
        %v552 = vadd.f32 0.0, %v551
        %v553 = vpop.f32.mrb[0].mxu0
        %554 = vmatprep.mubr.f32.mxu0 0.0
        %555 = vmatmul.mubr.f32.gmra.mrb[0].mxu0 %v437
        %v556 = vpop.f32.mrb[0].mxu0
        %v557 = vadd.f32 0.0, %v556
        %v558 = vpop.f32.mrb[0].mxu0
        %559 = vmatprep.mubr.f32.mxu0 0.0
        %560 = vmatmul.mubr.f32.gmra.mrb[0].mxu0 %v440
        %v561 = vpop.f32.mrb[0].mxu0
        %v562 = vadd.f32 0.0, %v561
        %v563 = vpop.f32.mrb[0].mxu0
        %564 = vmatprep.mubr.f32.mxu0 0.0
        %565 = vmatmul.mubr.f32.gmra.mrb[0].mxu0 %v443
        %v566 = vpop.f32.mrb[0].mxu0
        %v567 = vadd.f32 0.0, %v566
        %v568 = vpop.f32.mrb[0].mxu0
        %569 = vmatprep.mubr.f32.mxu0 0.0
        %570 = vmatmul.mubr.f32.gmra.mrb[0].mxu0 %v446
        %v571 = vpop.f32.mrb[0].mxu0
        %v572 = vadd.f32 0.0, %v571
        %v573 = vpop.f32.mrb[0].mxu0
        %574 = vmatprep.mubr.f32.mxu0 0.0
        %575 = vmatmul.mubr.f32.gmra.mrb[0].mxu0 %v449
        %v576 = vpop.f32.mrb[0].mxu0
        %v577 = vadd.f32 0.0, %v576
        %v578 = vpop.f32.mrb[0].mxu0
        %579 = vmatprep.mubr.f32.mxu0 0.0
        %580 = vmatmul.mubr.f32.gmra.mrb[0].mxu0 %v452
        %v581 = vpop.f32.mrb[0].mxu0
        %v582 = vadd.f32 0.0, %v581
        %v583 = vpop.f32.mrb[0].mxu0
        %584 = vmatprep.mubr.f32.mxu0 0.0
        %585 = vmatmul.mubr.f32.gmra.mrb[0].mxu0 %v455
        %v586 = vpop.f32.mrb[0].mxu0
        %v587 = vadd.f32 0.0, %v586
        %v588 = vpop.f32.mrb[0].mxu0
        %589 = vmatprep.mubr.f32.mxu0 0.0
        %590 = vmatmul.mubr.f32.gmra.mrb[0].mxu0 %v458
        %v591 = vpop.f32.mrb[0].mxu0
        %v592 = vadd.f32 0.0, %v591
        %v593 = vpop.f32.mrb[0].mxu0
        %594 = vmatprep.mubr.f32.mxu0 0.0
        %595 = vmatmul.mubr.f32.gmra.mrb[0].mxu0 %v461
        %v596 = vpop.f32.mrb[0].mxu0
        %v597 = vadd.f32 0.0, %v596
        %v598 = vpop.f32.mrb[0].mxu0
        %599 = vmatprep.mubr.f32.mxu0 0.0
        %600 = vmatmul.mubr.f32.gmra.mrb[0].mxu0 %v464
        %v601 = vpop.f32.mrb[0].mxu0
        %v602 = vadd.f32 0.0, %v601
        %v603 = vpop.f32.mrb[0].mxu0
        %604 = vmatprep.mubr.f32.mxu0 0.0
        %605 = vmatmul.mubr.f32.gmra.mrb[0].mxu0 %v467
        %v606 = vpop.f32.mrb[0].mxu0
        %v607 = vadd.f32 0.0, %v606
        %v608 = vpop.f32.mrb[0].mxu0
        %609 = vmatprep.mubr.f32.mxu0 0.0
        %610 = vmatmul.mubr.f32.gmra.mrb[0].mxu0 %v470
        %v611 = vpop.f32.mrb[0].mxu0
        %v612 = vadd.f32 0.0, %v611
        %v613 = vpop.f32.mrb[0].mxu0
        %614 = vmatprep.mubr.f32.mxu0 0.0
        %615 = vmatmul.mubr.f32.gmra.mrb[0].mxu0 %v473
        %v616 = vpop.f32.mrb[0].mxu0
        %v617 = vadd.f32 0.0, %v616
        %v618 = vpop.f32.mrb[0].mxu0
        %619 = vmatprep.mubr.f32.mxu0 0.0
        %620 = vmatmul.mubr.f32.gmra.mrb[0].mxu0 %v476
        %v621 = vpop.f32.mrb[0].mxu0
        %v622 = vadd.f32 0.0, %v621
        %v623 = vpop.f32.mrb[0].mxu0
        %624 = vmatprep.mubr.f32.mxu0 0.0
        %625 = vmatmul.mubr.f32.gmra.mrb[0].mxu0 %v479
        %v626 = vpop.f32.mrb[0].mxu0
        %v627 = vadd.f32 0.0, %v626
        %v628 = vpop.f32.mrb[0].mxu0
        %629 = vdwg.mxu0
        %v631 = vsel %vm432, %v398, 0
        %v634 = vsel %vm432, %v399, 0
        %v637 = vsel %vm432, %v400, 0
        %v640 = vsel %vm432, %v401, 0
        %v643 = vsel %vm432, %v402, 0
        %v646 = vsel %vm432, %v403, 0
        %v649 = vsel %vm432, %v404, 0
        %v652 = vsel %vm432, %v405, 0
        %v655 = vsel %vm432, %v406, 0
        %v658 = vsel %vm432, %v407, 0
        %v661 = vsel %vm432, %v408, 0
        %v664 = vsel %vm432, %v409, 0
        %v667 = vsel %vm432, %v410, 0
        %v670 = vsel %vm432, %v411, 0
        %v673 = vsel %vm432, %v412, 0
        %v676 = vsel %vm432, %v413, 0
        %v679 = vsel %vm481, %v414, 0
        %681 = vmatprep.subr.mxu0 0.0
        %682 = vmatpush1.msra.mxu0 %v679
        %683 = vmatprep.subr.mxu0 0.0
        %684 = vmatpush1.msra.mxu0 0.0
        %685 = vmatprep.subr.mxu0 0.0
        %686 = vmatpush1.msra.mxu0 0.0
        %687 = vmatprep.subr.mxu0 0.0
        %688 = vmatpush1.msra.mxu0 0.0
        %689 = vmatprep.subr.mxu0 0.0
        %690 = vmatpush1.msra.mxu0 0.0
        %691 = vmatprep.subr.mxu0 0.0
        %692 = vmatpush1.msra.mxu0 0.0
        %693 = vmatprep.subr.mxu0 0.0
        %694 = vmatpush1.msra.mxu0 0.0
        %695 = vmatprep.subr.mxu0 0.0
        %696 = vmatpush1.msra.mxu0 0.0
        %697 = vmatprep.subr.mxu0 0.0
        %698 = vmatpush1.msra.mxu0 0.0
        %699 = vmatprep.subr.mxu0 0.0
        %700 = vmatpush1.msra.mxu0 0.0
        %701 = vmatprep.subr.mxu0 0.0
        %702 = vmatpush1.msra.mxu0 0.0
        %703 = vmatprep.subr.mxu0 0.0
        %704 = vmatpush1.msra.mxu0 0.0
        %705 = vmatprep.subr.mxu0 0.0
        %706 = vmatpush1.msra.mxu0 0.0
        %707 = vmatprep.subr.mxu0 0.0
        %708 = vmatpush1.msra.mxu0 0.0
        %709 = vmatprep.subr.mxu0 0.0
        %710 = vmatpush1.msra.mxu0 0.0
        %711 = vmatprep.subr.mxu0 0.0
        %712 = vmatpush1.msra.mxu0 0.0
        %713 = vmatprep.subr.mxu0 0.0
        %714 = vmatpush1.msra.mxu0 0.0
        %715 = vmatprep.subr.mxu0 0.0
        %716 = vmatpush1.msra.mxu0 0.0
        %717 = vmatprep.subr.mxu0 0.0
        %718 = vmatpush1.msra.mxu0 0.0
        %719 = vmatprep.subr.mxu0 0.0
        %720 = vmatpush1.msra.mxu0 0.0
        %721 = vmatprep.subr.mxu0 0.0
        %722 = vmatpush1.msra.mxu0 0.0
        %723 = vmatprep.subr.mxu0 0.0
        %724 = vmatpush1.msra.mxu0 0.0
        %725 = vmatprep.subr.mxu0 0.0
        %726 = vmatpush1.msra.mxu0 0.0
        %727 = vmatprep.subr.mxu0 0.0
        %728 = vmatpush1.msra.mxu0 0.0
        %729 = vmatprep.subr.mxu0 0.0
        %730 = vmatpush1.msra.mxu0 0.0
        %731 = vmatprep.subr.mxu0 0.0
        %732 = vmatpush1.msra.mxu0 0.0
        %733 = vmatprep.subr.mxu0 0.0
        %734 = vmatpush1.msra.mxu0 0.0
        %735 = vmatprep.subr.mxu0 0.0
        %736 = vmatpush1.msra.mxu0 0.0
        %737 = vmatprep.subr.mxu0 0.0
        %738 = vmatpush1.msra.mxu0 0.0
        %739 = vmatprep.subr.mxu0 0.0
        %740 = vmatpush1.msra.mxu0 0.0
        %741 = vmatprep.subr.mxu0 0.0
        %742 = vmatpush1.msra.mxu0 0.0
        %743 = vmatprep.subr.mxu0 0.0
        %744 = vmatpush1.msra.mxu0 0.0
        %745 = vmatprep.mubr.f32.mxu0 0.0
        %746 = vmatmul.mubr.f32.gmra.mrb[0].mxu0 %v631
        %v747 = vpop.f32.mrb[0].mxu0
        %v748 = vadd.f32 %v552, %v747
        %v749 = vpop.f32.mrb[0].mxu0
        %750 = vmatprep.mubr.f32.mxu0 0.0
        %751 = vmatmul.mubr.f32.gmra.mrb[0].mxu0 %v634
        %v752 = vpop.f32.mrb[0].mxu0
        %v753 = vadd.f32 %v557, %v752
        %v754 = vpop.f32.mrb[0].mxu0
        %755 = vmatprep.mubr.f32.mxu0 0.0
        %756 = vmatmul.mubr.f32.gmra.mrb[0].mxu0 %v637
        %v757 = vpop.f32.mrb[0].mxu0
        %v758 = vadd.f32 %v562, %v757
        %v759 = vpop.f32.mrb[0].mxu0
        %760 = vmatprep.mubr.f32.mxu0 0.0
        %761 = vmatmul.mubr.f32.gmra.mrb[0].mxu0 %v640
        %v762 = vpop.f32.mrb[0].mxu0
        %v763 = vadd.f32 %v567, %v762
        %v764 = vpop.f32.mrb[0].mxu0
        %765 = vmatprep.mubr.f32.mxu0 0.0
        %766 = vmatmul.mubr.f32.gmra.mrb[0].mxu0 %v643
        %v767 = vpop.f32.mrb[0].mxu0
        %v768 = vadd.f32 %v572, %v767
        %v769 = vpop.f32.mrb[0].mxu0
        %770 = vmatprep.mubr.f32.mxu0 0.0
        %771 = vmatmul.mubr.f32.gmra.mrb[0].mxu0 %v646
        %v772 = vpop.f32.mrb[0].mxu0
        %v773 = vadd.f32 %v577, %v772
        %v774 = vpop.f32.mrb[0].mxu0
        %775 = vmatprep.mubr.f32.mxu0 0.0
        %776 = vmatmul.mubr.f32.gmra.mrb[0].mxu0 %v649
        %v777 = vpop.f32.mrb[0].mxu0
        %v778 = vadd.f32 %v582, %v777
        %v779 = vpop.f32.mrb[0].mxu0
        %780 = vmatprep.mubr.f32.mxu0 0.0
        %781 = vmatmul.mubr.f32.gmra.mrb[0].mxu0 %v652
        %v782 = vpop.f32.mrb[0].mxu0
        %v783 = vadd.f32 %v587, %v782
        %v784 = vpop.f32.mrb[0].mxu0
        %785 = vmatprep.mubr.f32.mxu0 0.0
        %786 = vmatmul.mubr.f32.gmra.mrb[0].mxu0 %v655
        %v787 = vpop.f32.mrb[0].mxu0
        %v788 = vadd.f32 %v592, %v787
        %v789 = vpop.f32.mrb[0].mxu0
        %790 = vmatprep.mubr.f32.mxu0 0.0
        %791 = vmatmul.mubr.f32.gmra.mrb[0].mxu0 %v658
        %v792 = vpop.f32.mrb[0].mxu0
        %v793 = vadd.f32 %v597, %v792
        %v794 = vpop.f32.mrb[0].mxu0
        %795 = vmatprep.mubr.f32.mxu0 0.0
        %796 = vmatmul.mubr.f32.gmra.mrb[0].mxu0 %v661
        %v797 = vpop.f32.mrb[0].mxu0
        %v798 = vadd.f32 %v602, %v797
        %v799 = vpop.f32.mrb[0].mxu0
        %800 = vmatprep.mubr.f32.mxu0 0.0
        %801 = vmatmul.mubr.f32.gmra.mrb[0].mxu0 %v664
        %v802 = vpop.f32.mrb[0].mxu0
        %v803 = vadd.f32 %v607, %v802
        %v804 = vpop.f32.mrb[0].mxu0
        %805 = vmatprep.mubr.f32.mxu0 0.0
        %806 = vmatmul.mubr.f32.gmra.mrb[0].mxu0 %v667
        %v807 = vpop.f32.mrb[0].mxu0
        %v808 = vadd.f32 %v612, %v807
        %v809 = vpop.f32.mrb[0].mxu0
        %810 = vmatprep.mubr.f32.mxu0 0.0
        %811 = vmatmul.mubr.f32.gmra.mrb[0].mxu0 %v670
        %v812 = vpop.f32.mrb[0].mxu0
        %v813 = vadd.f32 %v617, %v812
        %v814 = vpop.f32.mrb[0].mxu0
        %815 = vmatprep.mubr.f32.mxu0 0.0
        %816 = vmatmul.mubr.f32.gmra.mrb[0].mxu0 %v673
        %v817 = vpop.f32.mrb[0].mxu0
        %v818 = vadd.f32 %v622, %v817
        %v819 = vpop.f32.mrb[0].mxu0
        %820 = vmatprep.mubr.f32.mxu0 0.0
        %821 = vmatmul.mubr.f32.gmra.mrb[0].mxu0 %v676
        %v822 = vpop.f32.mrb[0].mxu0
        %v823 = vadd.f32 %v627, %v822
        %v824 = vpop.f32.mrb[0].mxu0
        %825 = vdwg.mxu0
        %v826 = vld [vmem:[%s4] sm:$0x1]
        %v828 = vlaneseq
        %v829 = vshrl.u32 %v828, 7
        %v830 = vsub.s32 0, %v829
        %v831 = vrot.slane %v826, %v830
        %v833 = vadd.f32 %v748, %v831
        %v834 = vadd.f32 %v753, %v831
        %v835 = vadd.f32 %v758, %v831
        %v836 = vadd.f32 %v763, %v831
        %v837 = vadd.f32 %v768, %v831
        %v838 = vadd.f32 %v773, %v831
        %v839 = vadd.f32 %v778, %v831
        %v840 = vadd.f32 %v783, %v831
        %v841 = vadd.f32 %v788, %v831
        %v842 = vadd.f32 %v793, %v831
        %v843 = vadd.f32 %v798, %v831
        %v844 = vadd.f32 %v803, %v831
        %v845 = vadd.f32 %v808, %v831
        %v846 = vadd.f32 %v813, %v831
        %v847 = vadd.f32 %v818, %v831
        %v848 = vadd.f32 %v823, %v831
        %v849 = vmax.f32 %v833, 0.0
        %v850 = vmax.f32 %v834, 0.0
        %v851 = vmax.f32 %v835, 0.0
        %v852 = vmax.f32 %v836, 0.0
        %v853 = vmax.f32 %v837, 0.0
        %v854 = vmax.f32 %v838, 0.0
        %v855 = vmax.f32 %v839, 0.0
        %v856 = vmax.f32 %v840, 0.0
        %v857 = vmax.f32 %v841, 0.0
        %v858 = vmax.f32 %v842, 0.0
        %v859 = vmax.f32 %v843, 0.0
        %v860 = vmax.f32 %v844, 0.0
        %v861 = vmax.f32 %v845, 0.0
        %v862 = vmax.f32 %v846, 0.0
        %v863 = vmax.f32 %v847, 0.0
        %v864 = vmax.f32 %v848, 0.0
        %v865 = vld [vmem:[%s5] sm:$0xff]
        %v866 = vld [vmem:[%s5 + $0x8] sm:$0xff]
        %v867 = vld [vmem:[%s5 + $0x10] sm:$0xff]
        %v868 = vld [vmem:[%s5 + $0x18] sm:$0xff]
        %v869 = vld [vmem:[%s5 + $0x20] sm:$0xff]
        %v870 = vld [vmem:[%s5 + $0x28] sm:$0xff]
        %v871 = vld [vmem:[%s5 + $0x30] sm:$0xff]
        %v872 = vld [vmem:[%s5 + $0x38] sm:$0xff]
        %v873 = vld [vmem:[%s5 + $0x40] sm:$0xff]
        %v874 = vld [vmem:[%s5 + $0x48] sm:$0xff]
        %v875 = vld [vmem:[%s5 + $0x50] sm:$0xff]
        %v876 = vld [vmem:[%s5 + $0x58] sm:$0xff]
        %v877 = vld [vmem:[%s5 + $0x60] sm:$0xff]
        %v878 = vld [vmem:[%s5 + $0x68] sm:$0xff]
        %v879 = vld [vmem:[%s5 + $0x70] sm:$0xff]
        %v880 = vld [vmem:[%s5 + $0x78] sm:$0xff]
        %v881 = vld [vmem:[%s6] sm:$0x1]
        %v883 = vlaneseq
        %v884 = vshrl.u32 %v883, 7
        %v885 = vsub.s32 0, %v884
        %v886 = vrot.slane %v881, %v885
        %888 = vmatprep.subr.mxu0 0.0
        %889 = vmatpush1.msra.mxu0 %v865
        %890 = vmatprep.subr.mxu0 0.0
        %891 = vmatpush1.msra.mxu0 %v866
        %892 = vmatprep.subr.mxu0 0.0
        %893 = vmatpush1.msra.mxu0 %v867
        %894 = vmatprep.subr.mxu0 0.0
        %895 = vmatpush1.msra.mxu0 %v868
        %896 = vmatprep.subr.mxu0 0.0
        %897 = vmatpush1.msra.mxu0 %v869
        %898 = vmatprep.subr.mxu0 0.0
        %899 = vmatpush1.msra.mxu0 %v870
        %900 = vmatprep.subr.mxu0 0.0
        %901 = vmatpush1.msra.mxu0 %v871
        %902 = vmatprep.subr.mxu0 0.0
        %903 = vmatpush1.msra.mxu0 %v872
        %904 = vmatprep.subr.mxu0 0.0
        %905 = vmatpush1.msra.mxu0 %v873
        %906 = vmatprep.subr.mxu0 0.0
        %907 = vmatpush1.msra.mxu0 %v874
        %908 = vmatprep.subr.mxu0 0.0
        %909 = vmatpush1.msra.mxu0 %v875
        %910 = vmatprep.subr.mxu0 0.0
        %911 = vmatpush1.msra.mxu0 %v876
        %912 = vmatprep.subr.mxu0 0.0
        %913 = vmatpush1.msra.mxu0 %v877
        %914 = vmatprep.subr.mxu0 0.0
        %915 = vmatpush1.msra.mxu0 %v878
        %916 = vmatprep.subr.mxu0 0.0
        %917 = vmatpush1.msra.mxu0 %v879
        %918 = vmatprep.subr.mxu0 0.0
        %919 = vmatpush1.msra.mxu0 %v880
        %920 = vmatprep.subr.mxu0 0.0
        %921 = vmatpush1.msra.mxu0 0.0
        %922 = vmatprep.subr.mxu0 0.0
        %923 = vmatpush1.msra.mxu0 0.0
        %924 = vmatprep.subr.mxu0 0.0
        %925 = vmatpush1.msra.mxu0 0.0
        %926 = vmatprep.subr.mxu0 0.0
        %927 = vmatpush1.msra.mxu0 0.0
        %928 = vmatprep.subr.mxu0 0.0
        %929 = vmatpush1.msra.mxu0 0.0
        %930 = vmatprep.subr.mxu0 0.0
        %931 = vmatpush1.msra.mxu0 0.0
        %932 = vmatprep.subr.mxu0 0.0
        %933 = vmatpush1.msra.mxu0 0.0
        %934 = vmatprep.subr.mxu0 0.0
        %935 = vmatpush1.msra.mxu0 0.0
        %936 = vmatprep.subr.mxu0 0.0
        %937 = vmatpush1.msra.mxu0 0.0
        %938 = vmatprep.subr.mxu0 0.0
        %939 = vmatpush1.msra.mxu0 0.0
        %940 = vmatprep.subr.mxu0 0.0
        %941 = vmatpush1.msra.mxu0 0.0
        %942 = vmatprep.subr.mxu0 0.0
        %943 = vmatpush1.msra.mxu0 0.0
        %944 = vmatprep.subr.mxu0 0.0
        %945 = vmatpush1.msra.mxu0 0.0
        %946 = vmatprep.subr.mxu0 0.0
        %947 = vmatpush1.msra.mxu0 0.0
        %948 = vmatprep.subr.mxu0 0.0
        %949 = vmatpush1.msra.mxu0 0.0
        %950 = vmatprep.subr.mxu0 0.0
        %951 = vmatpush1.msra.mxu0 0.0
        %952 = vmatprep.mubr.f32.mxu0 0.0
        %953 = vmatmul.mubr.f32.gmra.mrb[0].mxu0 %v849
        %v954 = vpop.f32.mrb[0].mxu0
        %v955 = vadd.f32 %v886, %v954
        %v956 = vpop.f32.mrb[0].mxu0
        %957 = vmatprep.mubr.f32.mxu0 0.0
        %958 = vmatmul.mubr.f32.gmra.mrb[0].mxu0 %v850
        %v959 = vpop.f32.mrb[0].mxu0
        %v960 = vadd.f32 %v886, %v959
        %v961 = vpop.f32.mrb[0].mxu0
        %962 = vmatprep.mubr.f32.mxu0 0.0
        %963 = vmatmul.mubr.f32.gmra.mrb[0].mxu0 %v851
        %v964 = vpop.f32.mrb[0].mxu0
        %v965 = vadd.f32 %v886, %v964
        %v966 = vpop.f32.mrb[0].mxu0
        %967 = vmatprep.mubr.f32.mxu0 0.0
        %968 = vmatmul.mubr.f32.gmra.mrb[0].mxu0 %v852
        %v969 = vpop.f32.mrb[0].mxu0
        %v970 = vadd.f32 %v886, %v969
        %v971 = vpop.f32.mrb[0].mxu0
        %972 = vmatprep.mubr.f32.mxu0 0.0
        %973 = vmatmul.mubr.f32.gmra.mrb[0].mxu0 %v853
        %v974 = vpop.f32.mrb[0].mxu0
        %v975 = vadd.f32 %v886, %v974
        %v976 = vpop.f32.mrb[0].mxu0
        %977 = vmatprep.mubr.f32.mxu0 0.0
        %978 = vmatmul.mubr.f32.gmra.mrb[0].mxu0 %v854
        %v979 = vpop.f32.mrb[0].mxu0
        %v980 = vadd.f32 %v886, %v979
        %v981 = vpop.f32.mrb[0].mxu0
        %982 = vmatprep.mubr.f32.mxu0 0.0
        %983 = vmatmul.mubr.f32.gmra.mrb[0].mxu0 %v855
        %v984 = vpop.f32.mrb[0].mxu0
        %v985 = vadd.f32 %v886, %v984
        %v986 = vpop.f32.mrb[0].mxu0
        %987 = vmatprep.mubr.f32.mxu0 0.0
        %988 = vmatmul.mubr.f32.gmra.mrb[0].mxu0 %v856
        %v989 = vpop.f32.mrb[0].mxu0
        %v990 = vadd.f32 %v886, %v989
        %v991 = vpop.f32.mrb[0].mxu0
        %992 = vmatprep.mubr.f32.mxu0 0.0
        %993 = vmatmul.mubr.f32.gmra.mrb[0].mxu0 %v857
        %v994 = vpop.f32.mrb[0].mxu0
        %v995 = vadd.f32 %v886, %v994
        %v996 = vpop.f32.mrb[0].mxu0
        %997 = vmatprep.mubr.f32.mxu0 0.0
        %998 = vmatmul.mubr.f32.gmra.mrb[0].mxu0 %v858
        %v999 = vpop.f32.mrb[0].mxu0
        %v1000 = vadd.f32 %v886, %v999
        %v1001 = vpop.f32.mrb[0].mxu0
        %1002 = vmatprep.mubr.f32.mxu0 0.0
        %1003 = vmatmul.mubr.f32.gmra.mrb[0].mxu0 %v859
        %v1004 = vpop.f32.mrb[0].mxu0
        %v1005 = vadd.f32 %v886, %v1004
        %v1006 = vpop.f32.mrb[0].mxu0
        %1007 = vmatprep.mubr.f32.mxu0 0.0
        %1008 = vmatmul.mubr.f32.gmra.mrb[0].mxu0 %v860
        %v1009 = vpop.f32.mrb[0].mxu0
        %v1010 = vadd.f32 %v886, %v1009
        %v1011 = vpop.f32.mrb[0].mxu0
        %1012 = vmatprep.mubr.f32.mxu0 0.0
        %1013 = vmatmul.mubr.f32.gmra.mrb[0].mxu0 %v861
        %v1014 = vpop.f32.mrb[0].mxu0
        %v1015 = vadd.f32 %v886, %v1014
        %v1016 = vpop.f32.mrb[0].mxu0
        %1017 = vmatprep.mubr.f32.mxu0 0.0
        %1018 = vmatmul.mubr.f32.gmra.mrb[0].mxu0 %v862
        %v1019 = vpop.f32.mrb[0].mxu0
        %v1020 = vadd.f32 %v886, %v1019
        %v1021 = vpop.f32.mrb[0].mxu0
        %1022 = vmatprep.mubr.f32.mxu0 0.0
        %1023 = vmatmul.mubr.f32.gmra.mrb[0].mxu0 %v863
        %v1024 = vpop.f32.mrb[0].mxu0
        %v1025 = vadd.f32 %v886, %v1024
        %v1026 = vpop.f32.mrb[0].mxu0
        %1027 = vmatprep.mubr.f32.mxu0 0.0
        %1028 = vmatmul.mubr.f32.gmra.mrb[0].mxu0 %v864
        %v1029 = vpop.f32.mrb[0].mxu0
        %v1030 = vadd.f32 %v886, %v1029
        %v1031 = vpop.f32.mrb[0].mxu0
        %1032 = vdwg.mxu0
        %v1033 = vmax.f32 %v955, 0.0
        %v1034 = vmax.f32 %v960, 0.0
        %v1035 = vmax.f32 %v965, 0.0
        %v1036 = vmax.f32 %v970, 0.0
        %v1037 = vmax.f32 %v975, 0.0
        %v1038 = vmax.f32 %v980, 0.0
        %v1039 = vmax.f32 %v985, 0.0
        %v1040 = vmax.f32 %v990, 0.0
        %v1041 = vmax.f32 %v995, 0.0
        %v1042 = vmax.f32 %v1000, 0.0
        %v1043 = vmax.f32 %v1005, 0.0
        %v1044 = vmax.f32 %v1010, 0.0
        %v1045 = vmax.f32 %v1015, 0.0
        %v1046 = vmax.f32 %v1020, 0.0
        %v1047 = vmax.f32 %v1025, 0.0
        %v1048 = vmax.f32 %v1030, 0.0
        %v1049 = vld [vmem:[%s7] sm:$0xff]
        %v1050 = vld [vmem:[%s7 + $0x8] sm:$0xff]
        %v1051 = vld [vmem:[%s7 + $0x10] sm:$0xff]
        %v1052 = vld [vmem:[%s7 + $0x18] sm:$0xff]
        %v1053 = vld [vmem:[%s7 + $0x20] sm:$0xff]
        %v1054 = vld [vmem:[%s7 + $0x28] sm:$0xff]
        %v1055 = vld [vmem:[%s7 + $0x30] sm:$0xff]
        %v1056 = vld [vmem:[%s7 + $0x38] sm:$0xff]
        %v1057 = vld [vmem:[%s7 + $0x40] sm:$0xff]
        %v1058 = vld [vmem:[%s7 + $0x48] sm:$0xff]
        %v1059 = vld [vmem:[%s7 + $0x50] sm:$0xff]
        %v1060 = vld [vmem:[%s7 + $0x58] sm:$0xff]
        %v1061 = vld [vmem:[%s7 + $0x60] sm:$0xff]
        %v1062 = vld [vmem:[%s7 + $0x68] sm:$0xff]
        %v1063 = vld [vmem:[%s7 + $0x70] sm:$0xff]
        %v1064 = vld [vmem:[%s7 + $0x78] sm:$0xff]
        %v1065 = vld [vmem:[%s8] sm:$0x1]
        %v1067 = vlaneseq
        %v1068 = vshrl.u32 %v1067, 7
        %v1069 = vsub.s32 0, %v1068
        %v1070 = vrot.slane %v1065, %v1069
        %1072 = vmatprep.subr.mxu0 0.0
        %1073 = vmatpush1.msra.mxu0 %v1049
        %1074 = vmatprep.subr.mxu0 0.0
        %1075 = vmatpush1.msra.mxu0 %v1050
        %1076 = vmatprep.subr.mxu0 0.0
        %1077 = vmatpush1.msra.mxu0 %v1051
        %1078 = vmatprep.subr.mxu0 0.0
        %1079 = vmatpush1.msra.mxu0 %v1052
        %1080 = vmatprep.subr.mxu0 0.0
        %1081 = vmatpush1.msra.mxu0 %v1053
        %1082 = vmatprep.subr.mxu0 0.0
        %1083 = vmatpush1.msra.mxu0 %v1054
        %1084 = vmatprep.subr.mxu0 0.0
        %1085 = vmatpush1.msra.mxu0 %v1055
        %1086 = vmatprep.subr.mxu0 0.0
        %1087 = vmatpush1.msra.mxu0 %v1056
        %1088 = vmatprep.subr.mxu0 0.0
        %1089 = vmatpush1.msra.mxu0 %v1057
        %1090 = vmatprep.subr.mxu0 0.0
        %1091 = vmatpush1.msra.mxu0 %v1058
        %1092 = vmatprep.subr.mxu0 0.0
        %1093 = vmatpush1.msra.mxu0 %v1059
        %1094 = vmatprep.subr.mxu0 0.0
        %1095 = vmatpush1.msra.mxu0 %v1060
        %1096 = vmatprep.subr.mxu0 0.0
        %1097 = vmatpush1.msra.mxu0 %v1061
        %1098 = vmatprep.subr.mxu0 0.0
        %1099 = vmatpush1.msra.mxu0 %v1062
        %1100 = vmatprep.subr.mxu0 0.0
        %1101 = vmatpush1.msra.mxu0 %v1063
        %1102 = vmatprep.subr.mxu0 0.0
        %1103 = vmatpush1.msra.mxu0 %v1064
        %1104 = vmatprep.subr.mxu0 0.0
        %1105 = vmatpush1.msra.mxu0 0.0
        %1106 = vmatprep.subr.mxu0 0.0
        %1107 = vmatpush1.msra.mxu0 0.0
        %1108 = vmatprep.subr.mxu0 0.0
        %1109 = vmatpush1.msra.mxu0 0.0
        %1110 = vmatprep.subr.mxu0 0.0
        %1111 = vmatpush1.msra.mxu0 0.0
        %1112 = vmatprep.subr.mxu0 0.0
        %1113 = vmatpush1.msra.mxu0 0.0
        %1114 = vmatprep.subr.mxu0 0.0
        %1115 = vmatpush1.msra.mxu0 0.0
        %1116 = vmatprep.subr.mxu0 0.0
        %1117 = vmatpush1.msra.mxu0 0.0
        %1118 = vmatprep.subr.mxu0 0.0
        %1119 = vmatpush1.msra.mxu0 0.0
        %1120 = vmatprep.subr.mxu0 0.0
        %1121 = vmatpush1.msra.mxu0 0.0
        %1122 = vmatprep.subr.mxu0 0.0
        %1123 = vmatpush1.msra.mxu0 0.0
        %1124 = vmatprep.subr.mxu0 0.0
        %1125 = vmatpush1.msra.mxu0 0.0
        %1126 = vmatprep.subr.mxu0 0.0
        %1127 = vmatpush1.msra.mxu0 0.0
        %1128 = vmatprep.subr.mxu0 0.0
        %1129 = vmatpush1.msra.mxu0 0.0
        %1130 = vmatprep.subr.mxu0 0.0
        %1131 = vmatpush1.msra.mxu0 0.0
        %1132 = vmatprep.subr.mxu0 0.0
        %1133 = vmatpush1.msra.mxu0 0.0
        %1134 = vmatprep.subr.mxu0 0.0
        %1135 = vmatpush1.msra.mxu0 0.0
        %1136 = vmatprep.mubr.f32.mxu0 0.0
        %1137 = vmatmul.mubr.f32.gmra.mrb[0].mxu0 %v1033
        %v1138 = vpop.f32.mrb[0].mxu0
        %v1139 = vadd.f32 %v1070, %v1138
        %v1140 = vpop.f32.mrb[0].mxu0
        %1141 = vmatprep.mubr.f32.mxu0 0.0
        %1142 = vmatmul.mubr.f32.gmra.mrb[0].mxu0 %v1034
        %v1143 = vpop.f32.mrb[0].mxu0
        %v1144 = vadd.f32 %v1070, %v1143
        %v1145 = vpop.f32.mrb[0].mxu0
        %1146 = vmatprep.mubr.f32.mxu0 0.0
        %1147 = vmatmul.mubr.f32.gmra.mrb[0].mxu0 %v1035
        %v1148 = vpop.f32.mrb[0].mxu0
        %v1149 = vadd.f32 %v1070, %v1148
        %v1150 = vpop.f32.mrb[0].mxu0
        %1151 = vmatprep.mubr.f32.mxu0 0.0
        %1152 = vmatmul.mubr.f32.gmra.mrb[0].mxu0 %v1036
        %v1153 = vpop.f32.mrb[0].mxu0
        %v1154 = vadd.f32 %v1070, %v1153
        %v1155 = vpop.f32.mrb[0].mxu0
        %1156 = vmatprep.mubr.f32.mxu0 0.0
        %1157 = vmatmul.mubr.f32.gmra.mrb[0].mxu0 %v1037
        %v1158 = vpop.f32.mrb[0].mxu0
        %v1159 = vadd.f32 %v1070, %v1158
        %v1160 = vpop.f32.mrb[0].mxu0
        %1161 = vmatprep.mubr.f32.mxu0 0.0
        %1162 = vmatmul.mubr.f32.gmra.mrb[0].mxu0 %v1038
        %v1163 = vpop.f32.mrb[0].mxu0
        %v1164 = vadd.f32 %v1070, %v1163
        %v1165 = vpop.f32.mrb[0].mxu0
        %1166 = vmatprep.mubr.f32.mxu0 0.0
        %1167 = vmatmul.mubr.f32.gmra.mrb[0].mxu0 %v1039
        %v1168 = vpop.f32.mrb[0].mxu0
        %v1169 = vadd.f32 %v1070, %v1168
        %v1170 = vpop.f32.mrb[0].mxu0
        %1171 = vmatprep.mubr.f32.mxu0 0.0
        %1172 = vmatmul.mubr.f32.gmra.mrb[0].mxu0 %v1040
        %v1173 = vpop.f32.mrb[0].mxu0
        %v1174 = vadd.f32 %v1070, %v1173
        %v1175 = vpop.f32.mrb[0].mxu0
        %1176 = vmatprep.mubr.f32.mxu0 0.0
        %1177 = vmatmul.mubr.f32.gmra.mrb[0].mxu0 %v1041
        %v1178 = vpop.f32.mrb[0].mxu0
        %v1179 = vadd.f32 %v1070, %v1178
        %v1180 = vpop.f32.mrb[0].mxu0
        %1181 = vmatprep.mubr.f32.mxu0 0.0
        %1182 = vmatmul.mubr.f32.gmra.mrb[0].mxu0 %v1042
        %v1183 = vpop.f32.mrb[0].mxu0
        %v1184 = vadd.f32 %v1070, %v1183
        %v1185 = vpop.f32.mrb[0].mxu0
        %1186 = vmatprep.mubr.f32.mxu0 0.0
        %1187 = vmatmul.mubr.f32.gmra.mrb[0].mxu0 %v1043
        %v1188 = vpop.f32.mrb[0].mxu0
        %v1189 = vadd.f32 %v1070, %v1188
        %v1190 = vpop.f32.mrb[0].mxu0
        %1191 = vmatprep.mubr.f32.mxu0 0.0
        %1192 = vmatmul.mubr.f32.gmra.mrb[0].mxu0 %v1044
        %v1193 = vpop.f32.mrb[0].mxu0
        %v1194 = vadd.f32 %v1070, %v1193
        %v1195 = vpop.f32.mrb[0].mxu0
        %1196 = vmatprep.mubr.f32.mxu0 0.0
        %1197 = vmatmul.mubr.f32.gmra.mrb[0].mxu0 %v1045
        %v1198 = vpop.f32.mrb[0].mxu0
        %v1199 = vadd.f32 %v1070, %v1198
        %v1200 = vpop.f32.mrb[0].mxu0
        %1201 = vmatprep.mubr.f32.mxu0 0.0
        %1202 = vmatmul.mubr.f32.gmra.mrb[0].mxu0 %v1046
        %v1203 = vpop.f32.mrb[0].mxu0
        %v1204 = vadd.f32 %v1070, %v1203
        %v1205 = vpop.f32.mrb[0].mxu0
        %1206 = vmatprep.mubr.f32.mxu0 0.0
        %1207 = vmatmul.mubr.f32.gmra.mrb[0].mxu0 %v1047
        %v1208 = vpop.f32.mrb[0].mxu0
        %v1209 = vadd.f32 %v1070, %v1208
        %v1210 = vpop.f32.mrb[0].mxu0
        %1211 = vmatprep.mubr.f32.mxu0 0.0
        %1212 = vmatmul.mubr.f32.gmra.mrb[0].mxu0 %v1048
        %v1213 = vpop.f32.mrb[0].mxu0
        %v1214 = vadd.f32 %v1070, %v1213
        %v1215 = vpop.f32.mrb[0].mxu0
        %1216 = vdwg.mxu0
        %v1217 = vld [vmem:[%s390] sm:$0xff]
        %v1218 = vld [vmem:[%s390 + $0x8] sm:$0xff]
        %v1219 = vld [vmem:[%s390 + $0x10] sm:$0xff]
        %v1220 = vld [vmem:[%s390 + $0x18] sm:$0xff]
        %v1221 = vld [vmem:[%s390 + $0x20] sm:$0xff]
        %v1222 = vld [vmem:[%s390 + $0x28] sm:$0xff]
        %v1223 = vld [vmem:[%s390 + $0x30] sm:$0xff]
        %v1224 = vld [vmem:[%s390 + $0x38] sm:$0xff]
        %v1225 = vld [vmem:[%s390 + $0x40] sm:$0xff]
        %v1226 = vld [vmem:[%s390 + $0x48] sm:$0xff]
        %v1227 = vld [vmem:[%s390 + $0x50] sm:$0xff]
        %v1228 = vld [vmem:[%s390 + $0x58] sm:$0xff]
        %v1229 = vld [vmem:[%s390 + $0x60] sm:$0xff]
        %v1230 = vld [vmem:[%s390 + $0x68] sm:$0xff]
        %v1231 = vld [vmem:[%s390 + $0x70] sm:$0xff]
        %v1232 = vld [vmem:[%s390 + $0x78] sm:$0xff]
        %v1233 = vsub.f32 %v1139, %v1217
        %v1234 = vsub.f32 %v1144, %v1218
        %v1235 = vsub.f32 %v1149, %v1219
        %v1236 = vsub.f32 %v1154, %v1220
        %v1237 = vsub.f32 %v1159, %v1221
        %v1238 = vsub.f32 %v1164, %v1222
        %v1239 = vsub.f32 %v1169, %v1223
        %v1240 = vsub.f32 %v1174, %v1224
        %v1241 = vsub.f32 %v1179, %v1225
        %v1242 = vsub.f32 %v1184, %v1226
        %v1243 = vsub.f32 %v1189, %v1227
        %v1244 = vsub.f32 %v1194, %v1228
        %v1245 = vsub.f32 %v1199, %v1229
        %v1246 = vsub.f32 %v1204, %v1230
        %v1247 = vsub.f32 %v1209, %v1231
        %v1248 = vsub.f32 %v1214, %v1232
        %v1249 = vmul.f32 %v1233, %v1233
        %v1250 = vmul.f32 %v1234, %v1234
        %v1251 = vmul.f32 %v1235, %v1235
        %v1252 = vmul.f32 %v1236, %v1236
        %v1253 = vmul.f32 %v1237, %v1237
        %v1254 = vmul.f32 %v1238, %v1238
        %v1255 = vmul.f32 %v1239, %v1239
        %v1256 = vmul.f32 %v1240, %v1240
        %v1257 = vmul.f32 %v1241, %v1241
        %v1258 = vmul.f32 %v1242, %v1242
        %v1259 = vmul.f32 %v1243, %v1243
        %v1260 = vmul.f32 %v1244, %v1244
        %v1261 = vmul.f32 %v1245, %v1245
        %v1262 = vmul.f32 %v1246, %v1246
        %v1263 = vmul.f32 %v1247, %v1247
        %v1264 = vmul.f32 %v1248, %v1248
        %s1265 = smul.u32 %s22, 128
        %v1266 = vlaneseq
        %v1267 = vshrl.u32 %v1266, 7
        %v1268 = vadd.s32 %v1267, 8
        %v1269 = vadd.s32 %v1267, 16
        %v1270 = vadd.s32 %v1267, 24
        %v1271 = vadd.s32 %v1267, 32
        %v1272 = vadd.s32 %v1267, 40
        %v1273 = vadd.s32 %v1267, 48
        %v1274 = vadd.s32 %v1267, 56
        %v1275 = vadd.s32 %v1267, 64
        %v1276 = vadd.s32 %v1267, 72
        %v1277 = vadd.s32 %v1267, 80
        %v1278 = vadd.s32 %v1267, 88
        %v1279 = vadd.s32 %v1267, 96
        %v1280 = vadd.s32 %v1267, 104
        %v1281 = vadd.s32 %v1267, 112
        %v1282 = vadd.s32 %v1267, 120
        %v1283 = vstv %s1265
        %v1284 = vadd.s32 %v1283, %v1267
        %v1285 = vadd.s32 %v1283, %v1268
        %v1286 = vadd.s32 %v1283, %v1269
        %v1287 = vadd.s32 %v1283, %v1270
        %v1288 = vadd.s32 %v1283, %v1271
        %v1289 = vadd.s32 %v1283, %v1272
        %v1290 = vadd.s32 %v1283, %v1273
        %v1291 = vadd.s32 %v1283, %v1274
        %v1292 = vadd.s32 %v1283, %v1275
        %v1293 = vadd.s32 %v1283, %v1276
        %v1294 = vadd.s32 %v1283, %v1277
        %v1295 = vadd.s32 %v1283, %v1278
        %v1296 = vadd.s32 %v1283, %v1279
        %v1297 = vadd.s32 %v1283, %v1280
        %v1298 = vadd.s32 %v1283, %v1281
        %v1299 = vadd.s32 %v1283, %v1282
        %vm1300 = vcmp.lt.s32.totalorder %v1284, 200
        %vm1301 = vcmp.lt.s32.totalorder %v1285, 200
        %vm1302 = vcmp.lt.s32.totalorder %v1286, 200
        %vm1303 = vcmp.lt.s32.totalorder %v1287, 200
        %vm1304 = vcmp.lt.s32.totalorder %v1288, 200
        %vm1305 = vcmp.lt.s32.totalorder %v1289, 200
        %vm1306 = vcmp.lt.s32.totalorder %v1290, 200
        %vm1307 = vcmp.lt.s32.totalorder %v1291, 200
        %vm1308 = vcmp.lt.s32.totalorder %v1292, 200
        %vm1309 = vcmp.lt.s32.totalorder %v1293, 200
        %vm1310 = vcmp.lt.s32.totalorder %v1294, 200
        %vm1311 = vcmp.lt.s32.totalorder %v1295, 200
        %vm1312 = vcmp.lt.s32.totalorder %v1296, 200
        %vm1313 = vcmp.lt.s32.totalorder %v1297, 200
        %vm1314 = vcmp.lt.s32.totalorder %v1298, 200
        %vm1315 = vcmp.lt.s32.totalorder %v1299, 200
        %v1316 = vsel %vm1300, %v1249, 0.0
        %v1317 = vsel %vm1301, %v1250, 0.0
        %v1318 = vsel %vm1302, %v1251, 0.0
        %v1319 = vsel %vm1303, %v1252, 0.0
        %v1320 = vsel %vm1304, %v1253, 0.0
        %v1321 = vsel %vm1305, %v1254, 0.0
        %v1322 = vsel %vm1306, %v1255, 0.0
        %v1323 = vsel %vm1307, %v1256, 0.0
        %v1324 = vsel %vm1308, %v1257, 0.0
        %v1325 = vsel %vm1309, %v1258, 0.0
        %v1326 = vsel %vm1310, %v1259, 0.0
        %v1327 = vsel %vm1311, %v1260, 0.0
        %v1328 = vsel %vm1312, %v1261, 0.0
        %v1329 = vsel %vm1313, %v1262, 0.0
        %v1330 = vsel %vm1314, %v1263, 0.0
        %v1331 = vsel %vm1315, %v1264, 0.0
        %v1332 = vld [vmem:[#allocation2] sm:$0x1]
        %v1333 = vsel %vm432, %v1316, 0.0
        %v1334 = vsel %vm432, %v1317, 0.0
        %v1335 = vadd.f32 %v1333, %v1334
        %v1336 = vsel %vm432, %v1318, 0.0
        %v1337 = vadd.f32 %v1335, %v1336
        %v1338 = vsel %vm432, %v1319, 0.0
        %v1339 = vadd.f32 %v1337, %v1338
        %v1340 = vsel %vm432, %v1320, 0.0
        %v1341 = vadd.f32 %v1339, %v1340
        %v1342 = vsel %vm432, %v1321, 0.0
        %v1343 = vadd.f32 %v1341, %v1342
        %v1344 = vsel %vm432, %v1322, 0.0
        %v1345 = vadd.f32 %v1343, %v1344
        %v1346 = vsel %vm432, %v1323, 0.0
        %v1347 = vadd.f32 %v1345, %v1346
        %v1348 = vsel %vm432, %v1324, 0.0
        %v1349 = vadd.f32 %v1347, %v1348
        %v1350 = vsel %vm432, %v1325, 0.0
        %v1351 = vadd.f32 %v1349, %v1350
        %v1352 = vsel %vm432, %v1326, 0.0
        %v1353 = vadd.f32 %v1351, %v1352
        %v1354 = vsel %vm432, %v1327, 0.0
        %v1355 = vadd.f32 %v1353, %v1354
        %v1356 = vsel %vm432, %v1328, 0.0
        %v1357 = vadd.f32 %v1355, %v1356
        %v1358 = vsel %vm432, %v1329, 0.0
        %v1359 = vadd.f32 %v1357, %v1358
        %v1360 = vsel %vm432, %v1330, 0.0
        %v1361 = vadd.f32 %v1359, %v1360
        %v1362 = vsel %vm432, %v1331, 0.0
        %v1363 = vadd.f32 %v1361, %v1362
        %1364 = vadd.xlane.f32.xlu0 %v1363
        %v1365 = vpop.xlane.xlu0 %1364
        %v1366 = vrot.slane %v1365, 4
        %v1367 = vadd.f32 %v1365, %v1366
        %v1368 = vrot.slane %v1367, 2
        %v1369 = vadd.f32 %v1367, %v1368
        %v1370 = vrot.slane %v1369, 1
        %v1371 = vadd.f32 %v1369, %v1370
        %s1372 = vtos %v1371
        %v1373 = vstv %s1372
        %v1374 = vadd.f32 %v1332, %v1373
        %vm1375 = vcmask 0
        %1376 = vst.msk [vmem:[#allocation2] sm:$0x1] %vm1375, %v1374
        %p1377 = scmp.eq.s32.totalorder %s22, 1
        // Predicated region
        $region65: #{tpu_custom_call.1} parent=59 // pred_check
          %p1378 = pneg %p1377
        $region66: #{tpu_custom_call.1} parent=59 // pred_check_branch
          %1380 = sbr.rel (%p1378) target = $region68
        $region67: #{tpu_custom_call.1} parent=59 // pred_region
          %v1381 = vld [vmem:[#allocation2] sm:$0x1]
          %v1382 = vmul.f32 %v1381, 0.00125
          %1383 = vst.msk [vmem:[#allocation3] sm:$0x1] %vm1375, %v1382
        $region68: #{tpu_custom_call.1} parent=59 // pred_fallthru
          _
        // Predicated region
        $region69: #{tpu_custom_call.1} parent=59 // pred_check
          %p1384 = pneg %p260
        $region70: #{tpu_custom_call.1} parent=59 // pred_check_branch
          %1386 = sbr.rel (%p1384) target = $region72
        $region71: #{tpu_custom_call.1} parent=59 // pred_region
          %s1388 = ssub.s32 16, 16
          %1389 = vsyncadd [#allocation4], %s1388
          %s1391 = sshll.u32 [#allocation3], 4
          %s1392 = int_to_ptr.vmem [resolvable:$true] %s1391
          %1394 = dma.vmem_to_hbm [thread:$0]  %s1392, 16, %s10, [#allocation4]
        $region72: #{tpu_custom_call.1} parent=59 // pred_fallthru
          _
        // Predicated region
        $region73: #{tpu_custom_call.1} parent=59 // pred_check
          %p1395 = pneg %p260
        $region74: #{tpu_custom_call.1} parent=59 // pred_check_branch
          %1397 = sbr.rel (%p1395) target = $region76
        $region75: #{tpu_custom_call.1} parent=59 // pred_region
          %1398 = dma.done [#allocation4], 16
        $region76: #{tpu_custom_call.1} parent=59 // pred_fallthru
          _
      $region60: #{tpu_custom_call.1} parent=5 // pred_fallthru
        _
      %p1399 = scmp.le.s32.totalorder 2, %s17
      // Predicated region
      $region77: #{tpu_custom_call.1} parent=5 // pred_check
        %p1400 = pneg %p1399
      $region78: #{tpu_custom_call.1} parent=5 // pred_check_branch
        %1402 = sbr.rel (%p1400) target = $region80
      $region79: #{tpu_custom_call.1} parent=5 // pred_region
        %s1403 = ssub.s32 %s17, 2
      $region80: #{tpu_custom_call.1} parent=5 // pred_fallthru
        _
    $region6: #{tpu_custom_call.1} parent=1 // loop_footer
      %s21 = sadd.s32 1, %s17
    $region7: #{tpu_custom_call.1} parent=1 // loop_footer_branch
      %16 = sbr.rel target = $region3
    $region8: #{tpu_custom_call.1} parent=1 // loop_exit
      _
    %1404 = vsyncpa [#allocation4], 1
    %s1405 = scalar_lea.sflag [#allocation4], 1
    %1406 = vsyncpa %s1405, 1

</llo_original>
